<compile_context>
chip_gen: v7x
topology: tpu7x:2x2x1
jax: 0.10.0
libtpu: 0.0.40
codegen_flags: <defaults>
</compile_context>

<pallas_src>
import numpy as np
import jax
import jax.numpy as jnp
from jax.experimental import pallas as pl
from jax.experimental.pallas import tpu as pltpu

# ---------------------------------------------------------------- constants
N_FFT = 16
HOP = 8
F_BINS = N_FFT // 2          # Nyquist intentionally dropped (see NOTE above)
LEAKY = 0.2
LATENT_DIM = 8
ENC_CH = (8, 16, 32)


# ---------------------------------------------------------------- fused Pallas kernel
def _make_kernel(off32, off256, L, R):
    """Builds the kernel closed over the static slab offsets."""
    f32 = jnp.float32

    def sl(ref, off, name):
        o, r, c = off[name]
        return ref[o:o + r, 0:c]

    def kernel(x_ref, p32_ref, p256_ref, out_ref):
        x = x_ref[...]                                                 # [B, L] f32

        # ---- framing + windowed DFT analysis (replicate + mask + 1 matmul) ----
        repmat = sl(p32_ref, off32, "repmat")                          # [R, B]
        x_rep = jnp.dot(repmat, x, preferred_element_type=f32)         # [R, L]
        mask_in = sl(p256_ref, off256, "mask_in")                      # [R, 2L]
        xcat = jnp.concatenate([x_rep, x_rep], axis=-1) * mask_in      # [R, 2L]
        wdft = sl(p32_ref, off32, "wdft")                              # [2L, 2F]
        spec = jnp.dot(xcat, wdft, preferred_element_type=f32)         # [R, 2F]

        mask_prev = sl(p32_ref, off32, "mask_prev")                    # [R, 1]
        mask_next = sl(p32_ref, off32, "mask_next")                    # [R, 1]
        biases = sl(p32_ref, off32, "bias")                            # [8, 32]

        def conv3x3(h, name, brow, leaky):
            # time shifts on the XLU (sublane roll) + boundary masks; the
            # three time taps are fused into one MXU push via a lane concat.
            hp = pltpu.roll(h, 1, axis=0) * mask_prev                  # h[t-1]
            hn = pltpu.roll(h, R - 1, axis=0) * mask_next              # h[t+1]
            hcat = jnp.concatenate([hp, h, hn], axis=-1)               # [R, 3K]
            w = sl(p32_ref, off32, name)                               # [3K, N]
            y = jnp.dot(hcat, w, preferred_element_type=f32)
            y = y + biases[brow:brow + 1, 0:y.shape[1]]
            if leaky:
                y = jnp.where(y > 0, y, LEAKY * y)
            return y

        def dense(h, name, brow, act):
            w = sl(p32_ref, off32, name)
            y = jnp.dot(h, w, preferred_element_type=f32)
            y = y + biases[brow:brow + 1, 0:y.shape[1]]
            if act == "leaky":
                y = jnp.where(y > 0, y, LEAKY * y)
            else:
                y = jnp.tanh(y)
            return y

        # ---- encoder (freq 8 -> 4 -> 2 -> 1 baked into the tap matrices) ----
        h = conv3x3(spec, "e0w", 0, True)
        h = conv3x3(h, "e1w", 1, True)
        h = conv3x3(h, "e2w", 2, True)
        lat = dense(h, "latw", 3, "tanh")                              # [R, LATENT_DIM]

        # ---- decoder (freq 1 -> 2 -> 4 -> 8, nearest upsample baked in) ----
        h = dense(lat, "unlatw", 4, "leaky")
        h = conv3x3(h, "d2w", 5, True)
        h = conv3x3(h, "d1w", 6, True)
        rec = conv3x3(h, "d0w", 7, False)                              # [R, 2F]

        # ---- synthesis iDFT*window + overlap-add + norm, lane-dense output ----
        gtile = sl(p256_ref, off256, "gtile")                          # [2F, 2L]
        m_ola = sl(p256_ref, off256, "m_ola")                          # [R, 2L]
        frep = jnp.dot(rec, gtile, preferred_element_type=f32) * m_ola  # [R, 2L]
        ssum = sl(p32_ref, off32, "ssum")                              # [B, R]
        z = jnp.dot(ssum, frep, preferred_element_type=f32)            # [B, 2L]
        out_ref[...] = z[:, 0:L] + z[:, L:2 * L]                       # [B, L]

    return kernel


# ---------------------------------------------------------------- weight / constant construction (numpy, done once)
def _hann_window():
    n = np.arange(N_FFT)
    # shifted Hann -> never exactly zero (keeps OLA normalization sane)
    return 0.5 - 0.5 * np.cos(2.0 * np.pi * (n + 0.5) / N_FFT)


def _analysis_matrix(window):
    """[N_FFT, 2F]: windowed forward DFT, column layout j = 2*f + {0:re, 1:im}."""
    w = np.zeros((N_FFT, 2 * F_BINS), np.float64)
    n = np.arange(N_FFT)
    for f in range(F_BINS):
        ang = 2.0 * np.pi * n * f / N_FFT
        w[:, 2 * f] = window * np.cos(ang)
        w[:, 2 * f + 1] = -window * np.sin(ang)
    return w


def _synthesis_matrix(window):
    """[2F, N_FFT]: inverse DFT * synthesis window."""
    g = np.zeros((2 * F_BINS, N_FFT), np.float64)
    n = np.arange(N_FFT)
    for f in range(F_BINS):
        scale = 1.0 if f == 0 else 2.0
        ang = 2.0 * np.pi * n * f / N_FFT
        g[2 * f] = scale * np.cos(ang) / N_FFT
        g[2 * f + 1] = -scale * np.sin(ang) / N_FFT
    return g * window[None, :]


def _conv_tap_matrices(rng, c_in, c_out, f_in, f_out, mode):
    """Bake 3x3 conv freq taps (+ stride-2 / nearest-upsample + SAME padding)
    into time-tap matrices, stacked along K as [3*f_in*c_in, f_out*c_out]."""
    k = (rng.standard_normal((3, 3, c_in, c_out)) / np.sqrt(9.0 * c_in)).astype(np.float32)
    W = np.zeros((3, f_in * c_in, f_out * c_out), np.float32)
    for dt in range(3):
        for fo in range(f_out):
            for df in range(3):
                if mode == "down":                 # stride-2 in freq, SAME
                    fi = fo * 2 + df - 1
                    if fi < 0 or fi >= f_in:
                        continue
                else:                              # "up": x2 nearest upsample folded in
                    fu = fo + df - 1
                    if fu < 0 or fu >= 2 * f_in:
                        continue
                    fi = fu // 2
                W[dt, fi * c_in:(fi + 1) * c_in, fo * c_out:(fo + 1) * c_out] += k[df, dt]
    # stacking order matches the in-kernel concat [hp | h | hn]
    return np.concatenate([W[0], W[1], W[2]], axis=0)


class _Packer:
    """Packs many small f32 matrices into one slab; every block starts at a
    row offset that is a multiple of 8 so in-kernel slices stay sublane-aligned."""

    def __init__(self, lanes):
        self.lanes = lanes
        self.blocks = []
        self.offsets = {}
        self.rows = 0

    def add(self, name, arr):
        arr = np.asarray(arr, np.float32)
        r, c = arr.shape
        assert c <= self.lanes, (name, c, self.lanes)
        rpad = ((r + 7) // 8) * 8
        buf = np.zeros((rpad, self.lanes), np.float32)
        buf[:r, :c] = arr
        self.offsets[name] = (self.rows, r, c)
        self.blocks.append(buf)
        self.rows += rpad

    def finalize(self):
        return np.concatenate(self.blocks, axis=0), self.offsets


def build_constants(B, L, seed=0):
    assert L % HOP == 0 and L >= N_FFT
    T = (L - N_FFT) // HOP + 1          # real frames per batch item
    Tp = T + 1                          # +1 padding row -> per-batch row block is 16
    R = B * Tp                          # total activation rows (32 for B=2, L=128)
    window = _hann_window()
    wdft = _analysis_matrix(window)     # [16, 16]
    gfull = _synthesis_matrix(window)   # [16, 16]

    l = np.arange(L)
    # even/odd frame-phase tilings of the analysis / synthesis matrices
    wdft_tiled = np.concatenate([wdft[l % N_FFT, :], wdft[(l - HOP) % N_FFT, :]], axis=0)  # [2L, 2F]
    gtile = np.concatenate([gfull[:, l % N_FFT], gfull[:, (l - HOP) % N_FFT]], axis=1)     # [2F, 2L]

    t_of_row = np.tile(np.arange(Tp), B)                   # t index per row
    valid = (t_of_row < T)
    start = t_of_row * HOP
    in_win = (l[None, :] >= start[:, None]) & (l[None, :] < start[:, None] + N_FFT)        # [R, L]
    even = (t_of_row % 2 == 0)[:, None]
    mask_a = (in_win & even & valid[:, None]).astype(np.float64)
    mask_b = (in_win & (~even) & valid[:, None]).astype(np.float64)
    mask_in = np.concatenate([mask_a, mask_b], axis=1)     # [R, 2L]

    # OLA window-sum normalization per output sample, folded into the placement mask
    w2 = window * window
    norm = np.zeros(L, np.float64)
    for t in range(T):
        norm[t * HOP:t * HOP + N_FFT] += w2
    inv_norm = 1.0 / np.maximum(norm, 1e-6)
    m_ola = mask_in * np.concatenate([inv_norm, inv_norm])[None, :]    # [R, 2L]

    repmat = np.zeros((R, B), np.float64)                  # waveform row -> frame rows
    ssum = np.zeros((B, R), np.float64)                    # frame rows -> waveform row
    for b in range(B):
        repmat[b * Tp:b * Tp + T, b] = 1.0
        ssum[b, b * Tp:b * Tp + T] = 1.0
    mask_prev = ((t_of_row >= 1) & (t_of_row <= T - 1)).astype(np.float64)[:, None]  # [R,1]
    mask_next = (t_of_row <= T - 2).astype(np.float64)[:, None]                       # [R,1]

    rng = np.random.default_rng(seed)
    e0w = _conv_tap_matrices(rng, 2, ENC_CH[0], 8, 4, "down")
    e1w = _conv_tap_matrices(rng, ENC_CH[0], ENC_CH[1], 4, 2, "down")
    e2w = _conv_tap_matrices(rng, ENC_CH[1], ENC_CH[2], 2, 1, "down")
    latw = (rng.standard_normal((ENC_CH[2], LATENT_DIM)) / np.sqrt(ENC_CH[2])).astype(np.float32)
    unlatw = (rng.standard_normal((LATENT_DIM, ENC_CH[2])) / np.sqrt(LATENT_DIM)).astype(np.float32)
    d2w = _conv_tap_matrices(rng, ENC_CH[2], ENC_CH[1], 1, 2, "up")
    d1w = _conv_tap_matrices(rng, ENC_CH[1], ENC_CH[0], 2, 4, "up")
    d0w = _conv_tap_matrices(rng, ENC_CH[0], 2, 4, 8, "up")
    biases = np.zeros((8, 32), np.float32)   # zero in the synthetic stand-in

    p32 = _Packer(32)                        # narrow slab: weights / structural vectors
    p32.add("repmat", repmat)
    p32.add("wdft", wdft_tiled)
    p32.add("e0w", e0w); p32.add("e1w", e1w); p32.add("e2w", e2w)
    p32.add("latw", latw); p32.add("unlatw", unlatw)
    p32.add("d2w", d2w); p32.add("d1w", d1w); p32.add("d0w", d0w)
    p32.add("ssum", ssum)
    p32.add("mask_prev", mask_prev); p32.add("mask_next", mask_next)
    p32.add("bias", biases)
    slab32, off32 = p32.finalize()

    p256 = _Packer(2 * L)                    # wide slab: analysis / synthesis masks
    p256.add("mask_in", mask_in)
    p256.add("gtile", gtile)
    p256.add("m_ola", m_ola)
    slab256, off256 = p256.finalize()

    dims = dict(T=T, Tp=Tp, R=R)
    return jnp.asarray(slab32), jnp.asarray(slab256), off32, off256, dims


# ---------------------------------------------------------------- forward wrapper
def _flops(B, L, R):
    F2 = 2 * F_BINS
    macs = R * B * L                       # frame-row replication
    macs += R * (2 * L) * F2               # windowed DFT analysis
    macs += R * (3 * F2) * 32              # e0
    macs += 4 * R * 96 * 32                # e1, e2, d2, d1
    macs += R * 96 * F2                    # d0
    macs += R * 32 * LATENT_DIM + R * LATENT_DIM * 32
    macs += R * F2 * (2 * L)               # synthesis
    macs += B * R * (2 * L)                # OLA row-sum
    return 2 * macs


def make_forward(B, L, off32, off256, dims):
    R = dims["R"]
    kernel = _make_kernel(off32, off256, L, R)

    @jax.jit
    def forward(x, slab32, slab256):
        bytes_accessed = 4 * (x.size + slab32.size + slab256.size + B * L)
        cost = pl.CostEstimate(flops=_flops(B, L, R),
                               transcendentals=R * LATENT_DIM,
                               bytes_accessed=int(bytes_accessed))
        return pl.pallas_call(
            kernel,
            out_shape=jax.ShapeDtypeStruct((B, L), jnp.float32),
            cost_estimate=cost,
        )(x, slab32, slab256)

    return forward


# ---------------------------------------------------------------- main
if __name__ == "__main__":
    B, L = 2, 128
    key = jax.random.PRNGKey(0)
    x = jax.random.normal(key, (B, L), jnp.float32)

    slab32, slab256, off32, off256, dims = build_constants(B, L, seed=0)
    fwd = make_forward(B, L, off32, off256, dims)

    y = fwd(x, slab32, slab256)
    jax.block_until_ready(y)

    assert y.shape == (B, L) and y.dtype == jnp.float32
    assert bool(jnp.all(jnp.isfinite(y)))
    print("KERNEL_OK")
</pallas_src>

<mosaic_0001>
module attributes {stable_mosaic.version = 11 : i64} {
  func.func @kernel(%arg0: memref<2x128xf32, #tpu.memory_space<vmem>>, %arg1: memref<936x32xf32, #tpu.memory_space<vmem>>, %arg2: memref<80x256xf32, #tpu.memory_space<vmem>>, %arg3: memref<2x128xf32, #tpu.memory_space<vmem>>) attributes {dimension_semantics = [], scalar_prefetch = 0 : i64, scratch_operands = 0 : i64, tpu.core_type = #tpu.core_type<tc>} {
    %c0 = arith.constant 0 : index
    %c0_0 = arith.constant 0 : index
    %0 = vector.load %arg0[%c0, %c0_0] : memref<2x128xf32, #tpu.memory_space<vmem>>, vector<2x128xf32>
    %c0_1 = arith.constant 0 : index
    %c0_2 = arith.constant 0 : index
    %1 = vector.load %arg1[%c0_1, %c0_2] : memref<936x32xf32, #tpu.memory_space<vmem>>, vector<32x2xf32>
    %cst = arith.constant dense<0.000000e+00> : vector<32x128xf32>
    %2 = tpu.matmul %1, %0, %cst {dimension_numbers = #tpu.dot_dimension_numbers<[1], [0], [0], [1], [0, 0, 1, 1], [], []>} : vector<32x2xf32>, vector<2x128xf32>, vector<32x128xf32> -> vector<32x128xf32>
    %c0_3 = arith.constant 0 : index
    %c0_4 = arith.constant 0 : index
    %3 = vector.load %arg2[%c0_3, %c0_4] : memref<80x256xf32, #tpu.memory_space<vmem>>, vector<32x256xf32>
    %4 = tpu.concatenate %2, %2 in 1 : vector<32x128xf32>, vector<32x128xf32> -> vector<32x256xf32>
    %5 = arith.mulf %4, %3 : vector<32x256xf32>
    %c32 = arith.constant 32 : index
    %c0_5 = arith.constant 0 : index
    %6 = vector.load %arg1[%c32, %c0_5] : memref<936x32xf32, #tpu.memory_space<vmem>>, vector<256x16xf32>
    %cst_6 = arith.constant dense<0.000000e+00> : vector<32x16xf32>
    %7 = tpu.matmul %5, %6, %cst_6 {dimension_numbers = #tpu.dot_dimension_numbers<[1], [0], [0], [1], [0, 0, 1, 1], [], []>} : vector<32x256xf32>, vector<256x16xf32>, vector<32x16xf32> -> vector<32x16xf32>
    %c864 = arith.constant 864 : index
    %c0_7 = arith.constant 0 : index
    %8 = vector.load %arg1[%c864, %c0_7] : memref<936x32xf32, #tpu.memory_space<vmem>>, vector<32x1xf32>
    %c896 = arith.constant 896 : index
    %c0_8 = arith.constant 0 : index
    %9 = vector.load %arg1[%c896, %c0_8] : memref<936x32xf32, #tpu.memory_space<vmem>>, vector<32x1xf32>
    %c928 = arith.constant 928 : index
    %c0_9 = arith.constant 0 : index
    %10 = vector.load %arg1[%c928, %c0_9] : memref<936x32xf32, #tpu.memory_space<vmem>>, vector<8x32xf32>
    %c1_i32 = arith.constant 1 : i32
    %11 = tpu.dynamic_rotate %7 by %c1_i32 dim 0 : vector<32x16xf32>, i32 -> vector<32x16xf32>
    %12 = vector.broadcast %8 : vector<32x1xf32> to vector<32x16xf32>
    %13 = arith.mulf %11, %12 : vector<32x16xf32>
    %c31_i32 = arith.constant 31 : i32
    %14 = tpu.dynamic_rotate %7 by %c31_i32 dim 0 : vector<32x16xf32>, i32 -> vector<32x16xf32>
    %15 = vector.broadcast %9 : vector<32x1xf32> to vector<32x16xf32>
    %16 = arith.mulf %14, %15 : vector<32x16xf32>
    %17 = tpu.concatenate %13, %7, %16 in 1 : vector<32x16xf32>, vector<32x16xf32>, vector<32x16xf32> -> vector<32x48xf32>
    %c288 = arith.constant 288 : index
    %c0_10 = arith.constant 0 : index
    %18 = vector.load %arg1[%c288, %c0_10] : memref<936x32xf32, #tpu.memory_space<vmem>>, vector<48x32xf32>
    %cst_11 = arith.constant dense<0.000000e+00> : vector<32x32xf32>
    %19 = tpu.matmul %17, %18, %cst_11 {dimension_numbers = #tpu.dot_dimension_numbers<[1], [0], [0], [1], [0, 0, 1, 1], [], []>} : vector<32x48xf32>, vector<48x32xf32>, vector<32x32xf32> -> vector<32x32xf32>
    %20 = vector.extract_strided_slice %10 {offsets = [0, 0], sizes = [1, 32], strides = [1, 1]} : vector<8x32xf32> to vector<1x32xf32>
    %21 = vector.broadcast %20 : vector<1x32xf32> to vector<32x32xf32>
    %22 = arith.addf %19, %21 : vector<32x32xf32>
    %cst_12 = arith.constant 0.000000e+00 : f32
    %23 = vector.broadcast %cst_12 : f32 to vector<32x32xf32>
    %24 = arith.cmpf ogt, %22, %23 : vector<32x32xf32>
    %cst_13 = arith.constant 2.000000e-01 : f32
    %25 = vector.broadcast %cst_13 : f32 to vector<32x32xf32>
    %26 = arith.mulf %25, %22 : vector<32x32xf32>
    %27 = arith.select %24, %22, %26 : vector<32x32xi1>, vector<32x32xf32>
    %c1_i32_14 = arith.constant 1 : i32
    %28 = tpu.dynamic_rotate %27 by %c1_i32_14 dim 0 : vector<32x32xf32>, i32 -> vector<32x32xf32>
    %29 = vector.broadcast %8 : vector<32x1xf32> to vector<32x32xf32>
    %30 = arith.mulf %28, %29 : vector<32x32xf32>
    %c31_i32_15 = arith.constant 31 : i32
    %31 = tpu.dynamic_rotate %27 by %c31_i32_15 dim 0 : vector<32x32xf32>, i32 -> vector<32x32xf32>
    %32 = vector.broadcast %9 : vector<32x1xf32> to vector<32x32xf32>
    %33 = arith.mulf %31, %32 : vector<32x32xf32>
    %34 = tpu.concatenate %30, %27, %33 in 1 : vector<32x32xf32>, vector<32x32xf32>, vector<32x32xf32> -> vector<32x96xf32>
    %c336 = arith.constant 336 : index
    %c0_16 = arith.constant 0 : index
    %35 = vector.load %arg1[%c336, %c0_16] : memref<936x32xf32, #tpu.memory_space<vmem>>, vector<96x32xf32>
    %cst_17 = arith.constant dense<0.000000e+00> : vector<32x32xf32>
    %36 = tpu.matmul %34, %35, %cst_17 {dimension_numbers = #tpu.dot_dimension_numbers<[1], [0], [0], [1], [0, 0, 1, 1], [], []>} : vector<32x96xf32>, vector<96x32xf32>, vector<32x32xf32> -> vector<32x32xf32>
    %37 = vector.extract_strided_slice %10 {offsets = [1, 0], sizes = [1, 32], strides = [1, 1]} : vector<8x32xf32> to vector<1x32xf32>
    %38 = vector.broadcast %37 : vector<1x32xf32> to vector<32x32xf32>
    %39 = arith.addf %36, %38 : vector<32x32xf32>
    %cst_18 = arith.constant 0.000000e+00 : f32
    %40 = vector.broadcast %cst_18 : f32 to vector<32x32xf32>
    %41 = arith.cmpf ogt, %39, %40 : vector<32x32xf32>
    %cst_19 = arith.constant 2.000000e-01 : f32
    %42 = vector.broadcast %cst_19 : f32 to vector<32x32xf32>
    %43 = arith.mulf %42, %39 : vector<32x32xf32>
    %44 = arith.select %41, %39, %43 : vector<32x32xi1>, vector<32x32xf32>
    %c1_i32_20 = arith.constant 1 : i32
    %45 = tpu.dynamic_rotate %44 by %c1_i32_20 dim 0 : vector<32x32xf32>, i32 -> vector<32x32xf32>
    %46 = vector.broadcast %8 : vector<32x1xf32> to vector<32x32xf32>
    %47 = arith.mulf %45, %46 : vector<32x32xf32>
    %c31_i32_21 = arith.constant 31 : i32
    %48 = tpu.dynamic_rotate %44 by %c31_i32_21 dim 0 : vector<32x32xf32>, i32 -> vector<32x32xf32>
    %49 = vector.broadcast %9 : vector<32x1xf32> to vector<32x32xf32>
    %50 = arith.mulf %48, %49 : vector<32x32xf32>
    %51 = tpu.concatenate %47, %44, %50 in 1 : vector<32x32xf32>, vector<32x32xf32>, vector<32x32xf32> -> vector<32x96xf32>
    %c432 = arith.constant 432 : index
    %c0_22 = arith.constant 0 : index
    %52 = vector.load %arg1[%c432, %c0_22] : memref<936x32xf32, #tpu.memory_space<vmem>>, vector<96x32xf32>
    %cst_23 = arith.constant dense<0.000000e+00> : vector<32x32xf32>
    %53 = tpu.matmul %51, %52, %cst_23 {dimension_numbers = #tpu.dot_dimension_numbers<[1], [0], [0], [1], [0, 0, 1, 1], [], []>} : vector<32x96xf32>, vector<96x32xf32>, vector<32x32xf32> -> vector<32x32xf32>
    %54 = vector.extract_strided_slice %10 {offsets = [2, 0], sizes = [1, 32], strides = [1, 1]} : vector<8x32xf32> to vector<1x32xf32>
    %55 = vector.broadcast %54 : vector<1x32xf32> to vector<32x32xf32>
    %56 = arith.addf %53, %55 : vector<32x32xf32>
    %cst_24 = arith.constant 0.000000e+00 : f32
    %57 = vector.broadcast %cst_24 : f32 to vector<32x32xf32>
    %58 = arith.cmpf ogt, %56, %57 : vector<32x32xf32>
    %cst_25 = arith.constant 2.000000e-01 : f32
    %59 = vector.broadcast %cst_25 : f32 to vector<32x32xf32>
    %60 = arith.mulf %59, %56 : vector<32x32xf32>
    %61 = arith.select %58, %56, %60 : vector<32x32xi1>, vector<32x32xf32>
    %c528 = arith.constant 528 : index
    %c0_26 = arith.constant 0 : index
    %62 = vector.load %arg1[%c528, %c0_26] : memref<936x32xf32, #tpu.memory_space<vmem>>, vector<32x8xf32>
    %cst_27 = arith.constant dense<0.000000e+00> : vector<32x8xf32>
    %63 = tpu.matmul %61, %62, %cst_27 {dimension_numbers = #tpu.dot_dimension_numbers<[1], [0], [0], [1], [0, 0, 1, 1], [], []>} : vector<32x32xf32>, vector<32x8xf32>, vector<32x8xf32> -> vector<32x8xf32>
    %64 = vector.extract_strided_slice %10 {offsets = [3, 0], sizes = [1, 8], strides = [1, 1]} : vector<8x32xf32> to vector<1x8xf32>
    %65 = vector.broadcast %64 : vector<1x8xf32> to vector<32x8xf32>
    %66 = arith.addf %63, %65 : vector<32x8xf32>
    %67 = math.tanh %66 : vector<32x8xf32>
    %c560 = arith.constant 560 : index
    %c0_28 = arith.constant 0 : index
    %68 = vector.load %arg1[%c560, %c0_28] : memref<936x32xf32, #tpu.memory_space<vmem>>, vector<8x32xf32>
    %cst_29 = arith.constant dense<0.000000e+00> : vector<32x32xf32>
    %69 = tpu.matmul %67, %68, %cst_29 {dimension_numbers = #tpu.dot_dimension_numbers<[1], [0], [0], [1], [0, 0, 1, 1], [], []>} : vector<32x8xf32>, vector<8x32xf32>, vector<32x32xf32> -> vector<32x32xf32>
    %70 = vector.extract_strided_slice %10 {offsets = [4, 0], sizes = [1, 32], strides = [1, 1]} : vector<8x32xf32> to vector<1x32xf32>
    %71 = vector.broadcast %70 : vector<1x32xf32> to vector<32x32xf32>
    %72 = arith.addf %69, %71 : vector<32x32xf32>
    %cst_30 = arith.constant 0.000000e+00 : f32
    %73 = vector.broadcast %cst_30 : f32 to vector<32x32xf32>
    %74 = arith.cmpf ogt, %72, %73 : vector<32x32xf32>
    %cst_31 = arith.constant 2.000000e-01 : f32
    %75 = vector.broadcast %cst_31 : f32 to vector<32x32xf32>
    %76 = arith.mulf %75, %72 : vector<32x32xf32>
    %77 = arith.select %74, %72, %76 : vector<32x32xi1>, vector<32x32xf32>
    %c1_i32_32 = arith.constant 1 : i32
    %78 = tpu.dynamic_rotate %77 by %c1_i32_32 dim 0 : vector<32x32xf32>, i32 -> vector<32x32xf32>
    %79 = vector.broadcast %8 : vector<32x1xf32> to vector<32x32xf32>
    %80 = arith.mulf %78, %79 : vector<32x32xf32>
    %c31_i32_33 = arith.constant 31 : i32
    %81 = tpu.dynamic_rotate %77 by %c31_i32_33 dim 0 : vector<32x32xf32>, i32 -> vector<32x32xf32>
    %82 = vector.broadcast %9 : vector<32x1xf32> to vector<32x32xf32>
    %83 = arith.mulf %81, %82 : vector<32x32xf32>
    %84 = tpu.concatenate %80, %77, %83 in 1 : vector<32x32xf32>, vector<32x32xf32>, vector<32x32xf32> -> vector<32x96xf32>
    %c568 = arith.constant 568 : index
    %c0_34 = arith.constant 0 : index
    %85 = vector.load %arg1[%c568, %c0_34] : memref<936x32xf32, #tpu.memory_space<vmem>>, vector<96x32xf32>
    %cst_35 = arith.constant dense<0.000000e+00> : vector<32x32xf32>
    %86 = tpu.matmul %84, %85, %cst_35 {dimension_numbers = #tpu.dot_dimension_numbers<[1], [0], [0], [1], [0, 0, 1, 1], [], []>} : vector<32x96xf32>, vector<96x32xf32>, vector<32x32xf32> -> vector<32x32xf32>
    %87 = vector.extract_strided_slice %10 {offsets = [5, 0], sizes = [1, 32], strides = [1, 1]} : vector<8x32xf32> to vector<1x32xf32>
    %88 = vector.broadcast %87 : vector<1x32xf32> to vector<32x32xf32>
    %89 = arith.addf %86, %88 : vector<32x32xf32>
    %cst_36 = arith.constant 0.000000e+00 : f32
    %90 = vector.broadcast %cst_36 : f32 to vector<32x32xf32>
    %91 = arith.cmpf ogt, %89, %90 : vector<32x32xf32>
    %cst_37 = arith.constant 2.000000e-01 : f32
    %92 = vector.broadcast %cst_37 : f32 to vector<32x32xf32>
    %93 = arith.mulf %92, %89 : vector<32x32xf32>
    %94 = arith.select %91, %89, %93 : vector<32x32xi1>, vector<32x32xf32>
    %c1_i32_38 = arith.constant 1 : i32
    %95 = tpu.dynamic_rotate %94 by %c1_i32_38 dim 0 : vector<32x32xf32>, i32 -> vector<32x32xf32>
    %96 = vector.broadcast %8 : vector<32x1xf32> to vector<32x32xf32>
    %97 = arith.mulf %95, %96 : vector<32x32xf32>
    %c31_i32_39 = arith.constant 31 : i32
    %98 = tpu.dynamic_rotate %94 by %c31_i32_39 dim 0 : vector<32x32xf32>, i32 -> vector<32x32xf32>
    %99 = vector.broadcast %9 : vector<32x1xf32> to vector<32x32xf32>
    %100 = arith.mulf %98, %99 : vector<32x32xf32>
    %101 = tpu.concatenate %97, %94, %100 in 1 : vector<32x32xf32>, vector<32x32xf32>, vector<32x32xf32> -> vector<32x96xf32>
    %c664 = arith.constant 664 : index
    %c0_40 = arith.constant 0 : index
    %102 = vector.load %arg1[%c664, %c0_40] : memref<936x32xf32, #tpu.memory_space<vmem>>, vector<96x32xf32>
    %cst_41 = arith.constant dense<0.000000e+00> : vector<32x32xf32>
    %103 = tpu.matmul %101, %102, %cst_41 {dimension_numbers = #tpu.dot_dimension_numbers<[1], [0], [0], [1], [0, 0, 1, 1], [], []>} : vector<32x96xf32>, vector<96x32xf32>, vector<32x32xf32> -> vector<32x32xf32>
    %104 = vector.extract_strided_slice %10 {offsets = [6, 0], sizes = [1, 32], strides = [1, 1]} : vector<8x32xf32> to vector<1x32xf32>
    %105 = vector.broadcast %104 : vector<1x32xf32> to vector<32x32xf32>
    %106 = arith.addf %103, %105 : vector<32x32xf32>
    %cst_42 = arith.constant 0.000000e+00 : f32
    %107 = vector.broadcast %cst_42 : f32 to vector<32x32xf32>
    %108 = arith.cmpf ogt, %106, %107 : vector<32x32xf32>
    %cst_43 = arith.constant 2.000000e-01 : f32
    %109 = vector.broadcast %cst_43 : f32 to vector<32x32xf32>
    %110 = arith.mulf %109, %106 : vector<32x32xf32>
    %111 = arith.select %108, %106, %110 : vector<32x32xi1>, vector<32x32xf32>
    %c1_i32_44 = arith.constant 1 : i32
    %112 = tpu.dynamic_rotate %111 by %c1_i32_44 dim 0 : vector<32x32xf32>, i32 -> vector<32x32xf32>
    %113 = vector.broadcast %8 : vector<32x1xf32> to vector<32x32xf32>
    %114 = arith.mulf %112, %113 : vector<32x32xf32>
    %c31_i32_45 = arith.constant 31 : i32
    %115 = tpu.dynamic_rotate %111 by %c31_i32_45 dim 0 : vector<32x32xf32>, i32 -> vector<32x32xf32>
    %116 = vector.broadcast %9 : vector<32x1xf32> to vector<32x32xf32>
    %117 = arith.mulf %115, %116 : vector<32x32xf32>
    %118 = tpu.concatenate %114, %111, %117 in 1 : vector<32x32xf32>, vector<32x32xf32>, vector<32x32xf32> -> vector<32x96xf32>
    %c760 = arith.constant 760 : index
    %c0_46 = arith.constant 0 : index
    %119 = vector.load %arg1[%c760, %c0_46] : memref<936x32xf32, #tpu.memory_space<vmem>>, vector<96x16xf32>
    %cst_47 = arith.constant dense<0.000000e+00> : vector<32x16xf32>
    %120 = tpu.matmul %118, %119, %cst_47 {dimension_numbers = #tpu.dot_dimension_numbers<[1], [0], [0], [1], [0, 0, 1, 1], [], []>} : vector<32x96xf32>, vector<96x16xf32>, vector<32x16xf32> -> vector<32x16xf32>
    %121 = vector.extract_strided_slice %10 {offsets = [7, 0], sizes = [1, 16], strides = [1, 1]} : vector<8x32xf32> to vector<1x16xf32>
    %122 = vector.broadcast %121 : vector<1x16xf32> to vector<32x16xf32>
    %123 = arith.addf %120, %122 : vector<32x16xf32>
    %c32_48 = arith.constant 32 : index
    %c0_49 = arith.constant 0 : index
    %124 = vector.load %arg2[%c32_48, %c0_49] : memref<80x256xf32, #tpu.memory_space<vmem>>, vector<16x256xf32>
    %c48 = arith.constant 48 : index
    %c0_50 = arith.constant 0 : index
    %125 = vector.load %arg2[%c48, %c0_50] : memref<80x256xf32, #tpu.memory_space<vmem>>, vector<32x256xf32>
    %cst_51 = arith.constant dense<0.000000e+00> : vector<32x256xf32>
    %126 = tpu.matmul %123, %124, %cst_51 {dimension_numbers = #tpu.dot_dimension_numbers<[1], [0], [0], [1], [0, 0, 1, 1], [], []>} : vector<32x16xf32>, vector<16x256xf32>, vector<32x256xf32> -> vector<32x256xf32>
    %127 = arith.mulf %126, %125 : vector<32x256xf32>
    %c856 = arith.constant 856 : index
    %c0_52 = arith.constant 0 : index
    %128 = vector.load %arg1[%c856, %c0_52] : memref<936x32xf32, #tpu.memory_space<vmem>>, vector<2x32xf32>
    %cst_53 = arith.constant dense<0.000000e+00> : vector<2x256xf32>
    %129 = tpu.matmul %128, %127, %cst_53 {dimension_numbers = #tpu.dot_dimension_numbers<[1], [0], [0], [1], [0, 0, 1, 1], [], []>} : vector<2x32xf32>, vector<32x256xf32>, vector<2x256xf32> -> vector<2x256xf32>
    %130 = vector.extract_strided_slice %129 {offsets = [0, 0], sizes = [2, 128], strides = [1, 1]} : vector<2x256xf32> to vector<2x128xf32>
    %131 = vector.extract_strided_slice %129 {offsets = [0, 128], sizes = [2, 128], strides = [1, 1]} : vector<2x256xf32> to vector<2x128xf32>
    %132 = arith.addf %130, %131 : vector<2x128xf32>
    %c0_54 = arith.constant 0 : index
    %c0_55 = arith.constant 0 : index
    %133 = vector.load %arg3[%c0_54, %c0_55] : memref<2x128xf32, #tpu.memory_space<vmem>>, vector<2x128xf32>
    tpu.vector_store %arg3[%c0_54, %c0_55], %132 {strides = array<i32>} : memref<2x128xf32, #tpu.memory_space<vmem>>, vector<2x128xf32>,
    return
  }
}

</mosaic_0001>

<llo_original>
// kernel: forward.1
$region0: #{forward.1}
  #allocation0 [shape = 'u32[]', space=smem, size = 0x4, offset = 0x4, fixed_abs, tag = 'smem constant byte address 0x4 - core index']
  #allocation1 [shape = 'u32[144,128]{1,0:T(1,128)}', space=vmem, size = 0x12000, scoped, tag = 'internal scratch']
  %s0 = inlined_call_operand.vmem [shape: f32[2,128], index: 0, kind: input, shape index: {}]
  %s1 = inlined_call_operand.vmem [shape: f32[936,32], index: 1, kind: input, shape index: {}]
  %s2 = inlined_call_operand.vmem [shape: f32[80,256], index: 2, kind: input, shape index: {}]
  %s3 = inlined_call_operand.hbm [shape: f32[2,128], index: 3, kind: output, shape index: {}]
  %s4 = sld [smem:[#allocation0]]
  $region22: #{forward.1} parent=0
    _
  %s6 = ssub.s32 1, %s4
  %s7 = scalar_select 0, %s6, %s4
  $region1: #{forward.1} parent=0
    #allocation2 [shape = 'u8[1024]{0}', space=vmem, size = 0x400, scoped, tag = 'output window, operand 0, single buffered']
    #allocation3 [shape = 's32[1]{0}', space=sflag, size = 0x4, scoped, tag = 'scoped memory for forward.1']
    %8 = vsyncpa [#allocation3], 0
    // Predicated region
    $region2: #{forward.1} parent=1 // pred_check
      _
    $region3: #{forward.1} parent=1 // pred_check_branch
      %10 = sbr.rel (0) target = $region5
    $region4: #{forward.1} parent=1 // pred_region
      _
    $region5: #{forward.1} parent=1 // pred_fallthru
      _
    // Predicated region
    $region6: #{forward.1} parent=1 // pred_check
      _
    $region7: #{forward.1} parent=1 // pred_check_branch
      %12 = sbr.rel (0) target = $region9
    $region8: #{forward.1} parent=1 // pred_region
      _
    $region9: #{forward.1} parent=1 // pred_fallthru
      _
    // Predicated region
    $region10: #{forward.1} parent=1 // pred_check
      _
    $region11: #{forward.1} parent=1 // pred_check_branch
      %14 = sbr.rel (0) target = $region13
    $region12: #{forward.1} parent=1 // pred_region
      _
    $region13: #{forward.1} parent=1 // pred_fallthru
      _
    %v15 = vld [vmem:[%s0] sm:$0x3]
    %v16 = vld [vmem:[%s1] sm:$0xff]
    %v17 = vld [vmem:[%s1 + $0x8] sm:$0xff]
    %v18 = vld [vmem:[%s1 + $0x10] sm:$0xff]
    %v19 = vld [vmem:[%s1 + $0x18] sm:$0xff]
    %vm20 = vcmask 15360
    %v22 = vsel %vm20, %v16, 0
    %v25 = vsel %vm20, %v17, 0
    %v28 = vsel %vm20, %v18, 0
    %v31 = vsel %vm20, %v19, 0
    %vm33 = vcmask 1041408
    %v35 = vsel %vm33, %v15, 0
    %37 = vmatprep.subr.mxu0 0.0
    %38 = vmatpush1.msra.mxu0 %v35
    %39 = vmatprep.subr.mxu0 0.0
    %40 = vmatpush1.msra.mxu0 0.0
    %41 = vmatprep.subr.mxu0 0.0
    %42 = vmatpush1.msra.mxu0 0.0
    %43 = vmatprep.subr.mxu0 0.0
    %44 = vmatpush1.msra.mxu0 0.0
    %45 = vmatprep.subr.mxu0 0.0
    %46 = vmatpush1.msra.mxu0 0.0
    %47 = vmatprep.subr.mxu0 0.0
    %48 = vmatpush1.msra.mxu0 0.0
    %49 = vmatprep.subr.mxu0 0.0
    %50 = vmatpush1.msra.mxu0 0.0
    %51 = vmatprep.subr.mxu0 0.0
    %52 = vmatpush1.msra.mxu0 0.0
    %53 = vmatprep.subr.mxu0 0.0
    %54 = vmatpush1.msra.mxu0 0.0
    %55 = vmatprep.subr.mxu0 0.0
    %56 = vmatpush1.msra.mxu0 0.0
    %57 = vmatprep.subr.mxu0 0.0
    %58 = vmatpush1.msra.mxu0 0.0
    %59 = vmatprep.subr.mxu0 0.0
    %60 = vmatpush1.msra.mxu0 0.0
    %61 = vmatprep.subr.mxu0 0.0
    %62 = vmatpush1.msra.mxu0 0.0
    %63 = vmatprep.subr.mxu0 0.0
    %64 = vmatpush1.msra.mxu0 0.0
    %65 = vmatprep.subr.mxu0 0.0
    %66 = vmatpush1.msra.mxu0 0.0
    %67 = vmatprep.subr.mxu0 0.0
    %68 = vmatpush1.msra.mxu0 0.0
    %69 = vmatprep.subr.mxu0 0.0
    %70 = vmatpush1.msra.mxu0 0.0
    %71 = vmatprep.subr.mxu0 0.0
    %72 = vmatpush1.msra.mxu0 0.0
    %73 = vmatprep.subr.mxu0 0.0
    %74 = vmatpush1.msra.mxu0 0.0
    %75 = vmatprep.subr.mxu0 0.0
    %76 = vmatpush1.msra.mxu0 0.0
    %77 = vmatprep.subr.mxu0 0.0
    %78 = vmatpush1.msra.mxu0 0.0
    %79 = vmatprep.subr.mxu0 0.0
    %80 = vmatpush1.msra.mxu0 0.0
    %81 = vmatprep.subr.mxu0 0.0
    %82 = vmatpush1.msra.mxu0 0.0
    %83 = vmatprep.subr.mxu0 0.0
    %84 = vmatpush1.msra.mxu0 0.0
    %85 = vmatprep.subr.mxu0 0.0
    %86 = vmatpush1.msra.mxu0 0.0
    %87 = vmatprep.subr.mxu0 0.0
    %88 = vmatpush1.msra.mxu0 0.0
    %89 = vmatprep.subr.mxu0 0.0
    %90 = vmatpush1.msra.mxu0 0.0
    %91 = vmatprep.subr.mxu0 0.0
    %92 = vmatpush1.msra.mxu0 0.0
    %93 = vmatprep.subr.mxu0 0.0
    %94 = vmatpush1.msra.mxu0 0.0
    %95 = vmatprep.subr.mxu0 0.0
    %96 = vmatpush1.msra.mxu0 0.0
    %97 = vmatprep.subr.mxu0 0.0
    %98 = vmatpush1.msra.mxu0 0.0
    %99 = vmatprep.subr.mxu0 0.0
    %100 = vmatpush1.msra.mxu0 0.0
    %101 = vmatprep.mubr.f32.mxu0 0.0
    %102 = vmatmul.mubr.f32.gmra.mrb[0].mxu0 %v22
    %v103 = vpop.f32.mrb[0].mxu0
    %v104 = vadd.f32 0.0, %v103
    %v105 = vpop.f32.mrb[0].mxu0
    %106 = vmatprep.mubr.f32.mxu0 0.0
    %107 = vmatmul.mubr.f32.gmra.mrb[0].mxu0 %v25
    %v108 = vpop.f32.mrb[0].mxu0
    %v109 = vadd.f32 0.0, %v108
    %v110 = vpop.f32.mrb[0].mxu0
    %111 = vmatprep.mubr.f32.mxu0 0.0
    %112 = vmatmul.mubr.f32.gmra.mrb[0].mxu0 %v28
    %v113 = vpop.f32.mrb[0].mxu0
    %v114 = vadd.f32 0.0, %v113
    %v115 = vpop.f32.mrb[0].mxu0
    %116 = vmatprep.mubr.f32.mxu0 0.0
    %117 = vmatmul.mubr.f32.gmra.mrb[0].mxu0 %v31
    %v118 = vpop.f32.mrb[0].mxu0
    %v119 = vadd.f32 0.0, %v118
    %v120 = vpop.f32.mrb[0].mxu0
    %121 = vdwg.mxu0
    %v122 = vld [vmem:[%s2] sm:$0xff]
    %v123 = vld [vmem:[%s2 + $0x8] sm:$0xff]
    %v124 = vld [vmem:[%s2 + $0x10] sm:$0xff]
    %v125 = vld [vmem:[%s2 + $0x18] sm:$0xff]
    %v126 = vld [vmem:[%s2 + $0x20] sm:$0xff]
    %v127 = vld [vmem:[%s2 + $0x28] sm:$0xff]
    %v128 = vld [vmem:[%s2 + $0x30] sm:$0xff]
    %v129 = vld [vmem:[%s2 + $0x38] sm:$0xff]
    %v130 = vmul.f32 %v104, %v122
    %v131 = vmul.f32 %v104, %v123
    %v132 = vmul.f32 %v109, %v124
    %v133 = vmul.f32 %v109, %v125
    %v134 = vmul.f32 %v114, %v126
    %v135 = vmul.f32 %v114, %v127
    %v136 = vmul.f32 %v119, %v128
    %v137 = vmul.f32 %v119, %v129
    %v138 = vld [vmem:[%s1 + $0x20] sm:$0xff]
    %v139 = vld [vmem:[%s1 + $0x28] sm:$0xff]
    %v140 = vld [vmem:[%s1 + $0x30] sm:$0xff]
    %v141 = vld [vmem:[%s1 + $0x38] sm:$0xff]
    %v142 = vld [vmem:[%s1 + $0x40] sm:$0xff]
    %v143 = vld [vmem:[%s1 + $0x48] sm:$0xff]
    %v144 = vld [vmem:[%s1 + $0x50] sm:$0xff]
    %v145 = vld [vmem:[%s1 + $0x58] sm:$0xff]
    %v146 = vld [vmem:[%s1 + $0x60] sm:$0xff]
    %v147 = vld [vmem:[%s1 + $0x68] sm:$0xff]
    %v148 = vld [vmem:[%s1 + $0x70] sm:$0xff]
    %v149 = vld [vmem:[%s1 + $0x78] sm:$0xff]
    %v150 = vld [vmem:[%s1 + $0x80] sm:$0xff]
    %v151 = vld [vmem:[%s1 + $0x88] sm:$0xff]
    %v152 = vld [vmem:[%s1 + $0x90] sm:$0xff]
    %v153 = vld [vmem:[%s1 + $0x98] sm:$0xff]
    %v154 = vld [vmem:[%s1 + $0xa0] sm:$0xff]
    %v155 = vld [vmem:[%s1 + $0xa8] sm:$0xff]
    %v156 = vld [vmem:[%s1 + $0xb0] sm:$0xff]
    %v157 = vld [vmem:[%s1 + $0xb8] sm:$0xff]
    %v158 = vld [vmem:[%s1 + $0xc0] sm:$0xff]
    %v159 = vld [vmem:[%s1 + $0xc8] sm:$0xff]
    %v160 = vld [vmem:[%s1 + $0xd0] sm:$0xff]
    %v161 = vld [vmem:[%s1 + $0xd8] sm:$0xff]
    %v162 = vld [vmem:[%s1 + $0xe0] sm:$0xff]
    %v163 = vld [vmem:[%s1 + $0xe8] sm:$0xff]
    %v164 = vld [vmem:[%s1 + $0xf0] sm:$0xff]
    %v165 = vld [vmem:[%s1 + $0xf8] sm:$0xff]
    %v166 = vld [vmem:[%s1 + $0x100] sm:$0xff]
    %v167 = vld [vmem:[%s1 + $0x108] sm:$0xff]
    %v168 = vld [vmem:[%s1 + $0x110] sm:$0xff]
    %v169 = vld [vmem:[%s1 + $0x118] sm:$0xff]
    %170 = vmatprep.subr.mxu0 0.0
    %171 = vmatpush1.msra.mxu0 %v138
    %172 = vmatprep.subr.mxu0 0.0
    %173 = vmatpush1.msra.mxu0 %v139
    %174 = vmatprep.subr.mxu0 0.0
    %175 = vmatpush1.msra.mxu0 %v140
    %176 = vmatprep.subr.mxu0 0.0
    %177 = vmatpush1.msra.mxu0 %v141
    %178 = vmatprep.subr.mxu0 0.0
    %179 = vmatpush1.msra.mxu0 %v142
    %180 = vmatprep.subr.mxu0 0.0
    %181 = vmatpush1.msra.mxu0 %v143
    %182 = vmatprep.subr.mxu0 0.0
    %183 = vmatpush1.msra.mxu0 %v144
    %184 = vmatprep.subr.mxu0 0.0
    %185 = vmatpush1.msra.mxu0 %v145
    %186 = vmatprep.subr.mxu0 0.0
    %187 = vmatpush1.msra.mxu0 %v146
    %188 = vmatprep.subr.mxu0 0.0
    %189 = vmatpush1.msra.mxu0 %v147
    %190 = vmatprep.subr.mxu0 0.0
    %191 = vmatpush1.msra.mxu0 %v148
    %192 = vmatprep.subr.mxu0 0.0
    %193 = vmatpush1.msra.mxu0 %v149
    %194 = vmatprep.subr.mxu0 0.0
    %195 = vmatpush1.msra.mxu0 %v150
    %196 = vmatprep.subr.mxu0 0.0
    %197 = vmatpush1.msra.mxu0 %v151
    %198 = vmatprep.subr.mxu0 0.0
    %199 = vmatpush1.msra.mxu0 %v152
    %200 = vmatprep.subr.mxu0 0.0
    %201 = vmatpush1.msra.mxu0 %v153
    %202 = vmatprep.subr.mxu0 0.0
    %203 = vmatpush1.msra.mxu0 %v154
    %204 = vmatprep.subr.mxu0 0.0
    %205 = vmatpush1.msra.mxu0 %v155
    %206 = vmatprep.subr.mxu0 0.0
    %207 = vmatpush1.msra.mxu0 %v156
    %208 = vmatprep.subr.mxu0 0.0
    %209 = vmatpush1.msra.mxu0 %v157
    %210 = vmatprep.subr.mxu0 0.0
    %211 = vmatpush1.msra.mxu0 %v158
    %212 = vmatprep.subr.mxu0 0.0
    %213 = vmatpush1.msra.mxu0 %v159
    %214 = vmatprep.subr.mxu0 0.0
    %215 = vmatpush1.msra.mxu0 %v160
    %216 = vmatprep.subr.mxu0 0.0
    %217 = vmatpush1.msra.mxu0 %v161
    %218 = vmatprep.subr.mxu0 0.0
    %219 = vmatpush1.msra.mxu0 %v162
    %220 = vmatprep.subr.mxu0 0.0
    %221 = vmatpush1.msra.mxu0 %v163
    %222 = vmatprep.subr.mxu0 0.0
    %223 = vmatpush1.msra.mxu0 %v164
    %224 = vmatprep.subr.mxu0 0.0
    %225 = vmatpush1.msra.mxu0 %v165
    %226 = vmatprep.subr.mxu0 0.0
    %227 = vmatpush1.msra.mxu0 %v166
    %228 = vmatprep.subr.mxu0 0.0
    %229 = vmatpush1.msra.mxu0 %v167
    %230 = vmatprep.subr.mxu0 0.0
    %231 = vmatpush1.msra.mxu0 %v168
    %232 = vmatprep.subr.mxu0 0.0
    %233 = vmatpush1.msra.mxu0 %v169
    %234 = vmatprep.mubr.f32.mxu0 %v131
    %235 = vmatmul.mubr.f32.gmra.mrb[0].mxu0 %v130
    %v236 = vpop.f32.mrb[0].mxu0
    %v237 = vadd.f32 0.0, %v236
    %v238 = vpop.f32.mrb[0].mxu0
    %239 = vmatprep.mubr.f32.mxu0 %v133
    %240 = vmatmul.mubr.f32.gmra.mrb[0].mxu0 %v132
    %v241 = vpop.f32.mrb[0].mxu0
    %v242 = vadd.f32 0.0, %v241
    %v243 = vpop.f32.mrb[0].mxu0
    %244 = vmatprep.mubr.f32.mxu0 %v135
    %245 = vmatmul.mubr.f32.gmra.mrb[0].mxu0 %v134
    %v246 = vpop.f32.mrb[0].mxu0
    %v247 = vadd.f32 0.0, %v246
    %v248 = vpop.f32.mrb[0].mxu0
    %249 = vmatprep.mubr.f32.mxu0 %v137
    %250 = vmatmul.mubr.f32.gmra.mrb[0].mxu0 %v136
    %v251 = vpop.f32.mrb[0].mxu0
    %v252 = vadd.f32 0.0, %v251
    %v253 = vpop.f32.mrb[0].mxu0
    %254 = vdwg.mxu0
    %v255 = vld [vmem:[%s1 + $0x360] sm:$0xff]
    %v256 = vld [vmem:[%s1 + $0x368] sm:$0xff]
    %v257 = vld [vmem:[%s1 + $0x370] sm:$0xff]
    %v258 = vld [vmem:[%s1 + $0x378] sm:$0xff]
    %v259 = vld [vmem:[%s1 + $0x380] sm:$0xff]
    %v260 = vld [vmem:[%s1 + $0x388] sm:$0xff]
    %v261 = vld [vmem:[%s1 + $0x390] sm:$0xff]
    %v262 = vld [vmem:[%s1 + $0x398] sm:$0xff]
    %v263 = vld [vmem:[%s1 + $0x3a0] sm:$0xff]
    %v264 = vrot.slane %v237, 7
    %v265 = vrot.slane %v242, 7
    %v266 = vrot.slane %v247, 7
    %v267 = vrot.slane %v252, 7
    %v268 = vlaneseq
    %v269 = vshrl.u32 %v268, 7
    %vm270 = vcmp.lt.s32.totalorder %v269, 1
    %v271 = vsel %vm270, %v266, %v267
    %v272 = vsel %vm270, %v265, %v266
    %v273 = vsel %vm270, %v264, %v265
    %v274 = vsel %vm270, %v267, %v264
    %276 = vset.pattern.permute.xlu0 0
    %277 = vperm.xlu0 %276, %v255
    %v278 = vpop.permute.xlu0 %277
    %281 = vset.pattern.permute.xlu0 0
    %282 = vperm.xlu0 %281, %v256
    %v283 = vpop.permute.xlu0 %282
    %286 = vset.pattern.permute.xlu0 0
    %287 = vperm.xlu0 %286, %v257
    %v288 = vpop.permute.xlu0 %287
    %291 = vset.pattern.permute.xlu0 0
    %292 = vperm.xlu0 %291, %v258
    %v293 = vpop.permute.xlu0 %292
    %v295 = vmul.f32 %v274, %v278
    %v296 = vmul.f32 %v273, %v283
    %v297 = vmul.f32 %v272, %v288
    %v298 = vmul.f32 %v271, %v293
    %v299 = vrot.slane %v237, 1
    %v300 = vrot.slane %v242, 1
    %v301 = vrot.slane %v247, 1
    %v302 = vrot.slane %v252, 1
    %vm303 = vcmp.lt.s32.totalorder %v269, 7
    %v304 = vsel %vm303, %v301, %v302
    %v305 = vsel %vm303, %v300, %v301
    %v306 = vsel %vm303, %v299, %v300
    %v307 = vsel %vm303, %v302, %v299
    %309 = vset.pattern.permute.xlu0 0
    %310 = vperm.xlu0 %309, %v259
    %v311 = vpop.permute.xlu0 %310
    %314 = vset.pattern.permute.xlu0 0
    %315 = vperm.xlu0 %314, %v260
    %v316 = vpop.permute.xlu0 %315
    %319 = vset.pattern.permute.xlu0 0
    %320 = vperm.xlu0 %319, %v261
    %v321 = vpop.permute.xlu0 %320
    %324 = vset.pattern.permute.xlu0 0
    %325 = vperm.xlu0 %324, %v262
    %v326 = vpop.permute.xlu0 %325
    %v328 = vmul.f32 %v306, %v311
    %v329 = vmul.f32 %v305, %v316
    %v330 = vmul.f32 %v304, %v321
    %v331 = vmul.f32 %v307, %v326
    %336 = vrot.lane.b32.xlu0 %v237, 16
    %v337 = vpop.permute.xlu0 %336
    %338 = vrot.lane.b32.xlu0 %v242, 16
    %v339 = vpop.permute.xlu0 %338
    %340 = vrot.lane.b32.xlu0 %v247, 16
    %v341 = vpop.permute.xlu0 %340
    %342 = vrot.lane.b32.xlu0 %v252, 16
    %v343 = vpop.permute.xlu0 %342
    %352 = vrot.lane.b32.xlu0 %v328, 32
    %v353 = vpop.permute.xlu0 %352
    %354 = vrot.lane.b32.xlu0 %v329, 32
    %v355 = vpop.permute.xlu0 %354
    %356 = vrot.lane.b32.xlu0 %v330, 32
    %v357 = vpop.permute.xlu0 %356
    %358 = vrot.lane.b32.xlu0 %v331, 32
    %v359 = vpop.permute.xlu0 %358
    %vm364 = vcmask 130048
    %v365 = vsel %vm364, %v295, %v337
    %v366 = vsel %vm364, %v296, %v339
    %v367 = vsel %vm364, %v297, %v341
    %v368 = vsel %vm364, %v298, %v343
    %vm369 = vcmask 261120
    %v370 = vsel %vm369, %v365, %v353
    %v371 = vsel %vm369, %v366, %v355
    %v372 = vsel %vm369, %v367, %v357
    %v373 = vsel %vm369, %v368, %v359
    %v374 = vld [vmem:[%s1 + $0x120] sm:$0xff]
    %v375 = vld [vmem:[%s1 + $0x128] sm:$0xff]
    %v376 = vld [vmem:[%s1 + $0x130] sm:$0xff]
    %v377 = vld [vmem:[%s1 + $0x138] sm:$0xff]
    %v378 = vld [vmem:[%s1 + $0x140] sm:$0xff]
    %v379 = vld [vmem:[%s1 + $0x148] sm:$0xff]
    %v380 = vlaneseq
    %v381 = vshrl.u32 %v380, 7
    %v382 = vsub.s32 0, %v381
    %v383 = vrot.slane %v263, %v382
    %vm384 = vcmask 392192
    %v386 = vsel %vm384, %v370, 0
    %v389 = vsel %vm384, %v371, 0
    %v392 = vsel %vm384, %v372, 0
    %v395 = vsel %vm384, %v373, 0
    %397 = vmatprep.subr.mxu0 0.0
    %398 = vmatpush1.msra.mxu0 %v374
    %399 = vmatprep.subr.mxu0 0.0
    %400 = vmatpush1.msra.mxu0 %v375
    %401 = vmatprep.subr.mxu0 0.0
    %402 = vmatpush1.msra.mxu0 %v376
    %403 = vmatprep.subr.mxu0 0.0
    %404 = vmatpush1.msra.mxu0 %v377
    %405 = vmatprep.subr.mxu0 0.0
    %406 = vmatpush1.msra.mxu0 %v378
    %407 = vmatprep.subr.mxu0 0.0
    %408 = vmatpush1.msra.mxu0 %v379
    %409 = vmatprep.subr.mxu0 0.0
    %410 = vmatpush1.msra.mxu0 0.0
    %411 = vmatprep.subr.mxu0 0.0
    %412 = vmatpush1.msra.mxu0 0.0
    %413 = vmatprep.subr.mxu0 0.0
    %414 = vmatpush1.msra.mxu0 0.0
    %415 = vmatprep.subr.mxu0 0.0
    %416 = vmatpush1.msra.mxu0 0.0
    %417 = vmatprep.subr.mxu0 0.0
    %418 = vmatpush1.msra.mxu0 0.0
    %419 = vmatprep.subr.mxu0 0.0
    %420 = vmatpush1.msra.mxu0 0.0
    %421 = vmatprep.subr.mxu0 0.0
    %422 = vmatpush1.msra.mxu0 0.0
    %423 = vmatprep.subr.mxu0 0.0
    %424 = vmatpush1.msra.mxu0 0.0
    %425 = vmatprep.subr.mxu0 0.0
    %426 = vmatpush1.msra.mxu0 0.0
    %427 = vmatprep.subr.mxu0 0.0
    %428 = vmatpush1.msra.mxu0 0.0
    %429 = vmatprep.subr.mxu0 0.0
    %430 = vmatpush1.msra.mxu0 0.0
    %431 = vmatprep.subr.mxu0 0.0
    %432 = vmatpush1.msra.mxu0 0.0
    %433 = vmatprep.subr.mxu0 0.0
    %434 = vmatpush1.msra.mxu0 0.0
    %435 = vmatprep.subr.mxu0 0.0
    %436 = vmatpush1.msra.mxu0 0.0
    %437 = vmatprep.subr.mxu0 0.0
    %438 = vmatpush1.msra.mxu0 0.0
    %439 = vmatprep.subr.mxu0 0.0
    %440 = vmatpush1.msra.mxu0 0.0
    %441 = vmatprep.subr.mxu0 0.0
    %442 = vmatpush1.msra.mxu0 0.0
    %443 = vmatprep.subr.mxu0 0.0
    %444 = vmatpush1.msra.mxu0 0.0
    %445 = vmatprep.subr.mxu0 0.0
    %446 = vmatpush1.msra.mxu0 0.0
    %447 = vmatprep.subr.mxu0 0.0
    %448 = vmatpush1.msra.mxu0 0.0
    %449 = vmatprep.subr.mxu0 0.0
    %450 = vmatpush1.msra.mxu0 0.0
    %451 = vmatprep.subr.mxu0 0.0
    %452 = vmatpush1.msra.mxu0 0.0
    %453 = vmatprep.subr.mxu0 0.0
    %454 = vmatpush1.msra.mxu0 0.0
    %455 = vmatprep.subr.mxu0 0.0
    %456 = vmatpush1.msra.mxu0 0.0
    %457 = vmatprep.subr.mxu0 0.0
    %458 = vmatpush1.msra.mxu0 0.0
    %459 = vmatprep.subr.mxu0 0.0
    %460 = vmatpush1.msra.mxu0 0.0
    %461 = vmatprep.mubr.f32.mxu0 0.0
    %462 = vmatmul.mubr.f32.gmra.mrb[0].mxu0 %v386
    %v463 = vpop.f32.mrb[0].mxu0
    %v464 = vadd.f32 %v383, %v463
    %v465 = vpop.f32.mrb[0].mxu0
    %466 = vmatprep.mubr.f32.mxu0 0.0
    %467 = vmatmul.mubr.f32.gmra.mrb[0].mxu0 %v389
    %v468 = vpop.f32.mrb[0].mxu0
    %v469 = vadd.f32 %v383, %v468
    %v470 = vpop.f32.mrb[0].mxu0
    %471 = vmatprep.mubr.f32.mxu0 0.0
    %472 = vmatmul.mubr.f32.gmra.mrb[0].mxu0 %v392
    %v473 = vpop.f32.mrb[0].mxu0
    %v474 = vadd.f32 %v383, %v473
    %v475 = vpop.f32.mrb[0].mxu0
    %476 = vmatprep.mubr.f32.mxu0 0.0
    %477 = vmatmul.mubr.f32.gmra.mrb[0].mxu0 %v395
    %v478 = vpop.f32.mrb[0].mxu0
    %v479 = vadd.f32 %v383, %v478
    %v480 = vpop.f32.mrb[0].mxu0
    %481 = vdwg.mxu0
    %vm482 = vcmp.gt.f32.partialorder %v464, 0.0
    %vm483 = vcmp.gt.f32.partialorder %v469, 0.0
    %vm484 = vcmp.gt.f32.partialorder %v474, 0.0
    %vm485 = vcmp.gt.f32.partialorder %v479, 0.0
    %v486 = vmul.f32 %v464, 0.2
    %v487 = vmul.f32 %v469, 0.2
    %v488 = vmul.f32 %v474, 0.2
    %v489 = vmul.f32 %v479, 0.2
    %v490 = vsel %vm482, %v464, %v486
    %v491 = vsel %vm483, %v469, %v487
    %v492 = vsel %vm484, %v474, %v488
    %v493 = vsel %vm485, %v479, %v489
    %v494 = vrot.slane %v490, 7
    %v495 = vrot.slane %v491, 7
    %v496 = vrot.slane %v492, 7
    %v497 = vrot.slane %v493, 7
    %v498 = vsel %vm270, %v496, %v497
    %v499 = vsel %vm270, %v495, %v496
    %v500 = vsel %vm270, %v494, %v495
    %v501 = vsel %vm270, %v497, %v494
    %v502 = vmul.f32 %v501, %v278
    %v503 = vmul.f32 %v500, %v283
    %v504 = vmul.f32 %v499, %v288
    %v505 = vmul.f32 %v498, %v293
    %v506 = vrot.slane %v490, 1
    %v507 = vrot.slane %v491, 1
    %v508 = vrot.slane %v492, 1
    %v509 = vrot.slane %v493, 1
    %v510 = vsel %vm303, %v508, %v509
    %v511 = vsel %vm303, %v507, %v508
    %v512 = vsel %vm303, %v506, %v507
    %v513 = vsel %vm303, %v509, %v506
    %v514 = vmul.f32 %v512, %v311
    %v515 = vmul.f32 %v511, %v316
    %v516 = vmul.f32 %v510, %v321
    %v517 = vmul.f32 %v513, %v326
    %522 = vrot.lane.b32.xlu0 %v490, 32
    %v523 = vpop.permute.xlu0 %522
    %524 = vrot.lane.b32.xlu0 %v491, 32
    %v525 = vpop.permute.xlu0 %524
    %526 = vrot.lane.b32.xlu0 %v492, 32
    %v527 = vpop.permute.xlu0 %526
    %528 = vrot.lane.b32.xlu0 %v493, 32
    %v529 = vpop.permute.xlu0 %528
    %538 = vrot.lane.b32.xlu0 %v514, 64
    %v539 = vpop.permute.xlu0 %538
    %540 = vrot.lane.b32.xlu0 %v515, 64
    %v541 = vpop.permute.xlu0 %540
    %542 = vrot.lane.b32.xlu0 %v516, 64
    %v543 = vpop.permute.xlu0 %542
    %544 = vrot.lane.b32.xlu0 %v517, 64
    %v545 = vpop.permute.xlu0 %544
    %v550 = vsel %vm369, %v502, %v523
    %v551 = vsel %vm369, %v503, %v525
    %v552 = vsel %vm369, %v504, %v527
    %v553 = vsel %vm369, %v505, %v529
    %vm554 = vcmask 523264
    %v555 = vsel %vm554, %v550, %v539
    %v556 = vsel %vm554, %v551, %v541
    %v557 = vsel %vm554, %v552, %v543
    %v558 = vsel %vm554, %v553, %v545
    %v559 = vld [vmem:[%s1 + $0x150] sm:$0xff]
    %v560 = vld [vmem:[%s1 + $0x158] sm:$0xff]
    %v561 = vld [vmem:[%s1 + $0x160] sm:$0xff]
    %v562 = vld [vmem:[%s1 + $0x168] sm:$0xff]
    %v563 = vld [vmem:[%s1 + $0x170] sm:$0xff]
    %v564 = vld [vmem:[%s1 + $0x178] sm:$0xff]
    %v565 = vld [vmem:[%s1 + $0x180] sm:$0xff]
    %v566 = vld [vmem:[%s1 + $0x188] sm:$0xff]
    %v567 = vld [vmem:[%s1 + $0x190] sm:$0xff]
    %v568 = vld [vmem:[%s1 + $0x198] sm:$0xff]
    %v569 = vld [vmem:[%s1 + $0x1a0] sm:$0xff]
    %v570 = vld [vmem:[%s1 + $0x1a8] sm:$0xff]
    %v571 = vlaneseq
    %v572 = vshrl.u32 %v571, 7
    %v573 = vsub.s32 1, %v572
    %v574 = vrot.slane %v263, %v573
    %vm575 = vcmask 785408
    %v577 = vsel %vm575, %v555, 0
    %v580 = vsel %vm575, %v556, 0
    %v583 = vsel %vm575, %v557, 0
    %v586 = vsel %vm575, %v558, 0
    %588 = vmatprep.subr.mxu0 0.0
    %589 = vmatpush1.msra.mxu0 %v559
    %590 = vmatprep.subr.mxu0 0.0
    %591 = vmatpush1.msra.mxu0 %v560
    %592 = vmatprep.subr.mxu0 0.0
    %593 = vmatpush1.msra.mxu0 %v561
    %594 = vmatprep.subr.mxu0 0.0
    %595 = vmatpush1.msra.mxu0 %v562
    %596 = vmatprep.subr.mxu0 0.0
    %597 = vmatpush1.msra.mxu0 %v563
    %598 = vmatprep.subr.mxu0 0.0
    %599 = vmatpush1.msra.mxu0 %v564
    %600 = vmatprep.subr.mxu0 0.0
    %601 = vmatpush1.msra.mxu0 %v565
    %602 = vmatprep.subr.mxu0 0.0
    %603 = vmatpush1.msra.mxu0 %v566
    %604 = vmatprep.subr.mxu0 0.0
    %605 = vmatpush1.msra.mxu0 %v567
    %606 = vmatprep.subr.mxu0 0.0
    %607 = vmatpush1.msra.mxu0 %v568
    %608 = vmatprep.subr.mxu0 0.0
    %609 = vmatpush1.msra.mxu0 %v569
    %610 = vmatprep.subr.mxu0 0.0
    %611 = vmatpush1.msra.mxu0 %v570
    %612 = vmatprep.subr.mxu0 0.0
    %613 = vmatpush1.msra.mxu0 0.0
    %614 = vmatprep.subr.mxu0 0.0
    %615 = vmatpush1.msra.mxu0 0.0
    %616 = vmatprep.subr.mxu0 0.0
    %617 = vmatpush1.msra.mxu0 0.0
    %618 = vmatprep.subr.mxu0 0.0
    %619 = vmatpush1.msra.mxu0 0.0
    %620 = vmatprep.subr.mxu0 0.0
    %621 = vmatpush1.msra.mxu0 0.0
    %622 = vmatprep.subr.mxu0 0.0
    %623 = vmatpush1.msra.mxu0 0.0
    %624 = vmatprep.subr.mxu0 0.0
    %625 = vmatpush1.msra.mxu0 0.0
    %626 = vmatprep.subr.mxu0 0.0
    %627 = vmatpush1.msra.mxu0 0.0
    %628 = vmatprep.subr.mxu0 0.0
    %629 = vmatpush1.msra.mxu0 0.0
    %630 = vmatprep.subr.mxu0 0.0
    %631 = vmatpush1.msra.mxu0 0.0
    %632 = vmatprep.subr.mxu0 0.0
    %633 = vmatpush1.msra.mxu0 0.0
    %634 = vmatprep.subr.mxu0 0.0
    %635 = vmatpush1.msra.mxu0 0.0
    %636 = vmatprep.subr.mxu0 0.0
    %637 = vmatpush1.msra.mxu0 0.0
    %638 = vmatprep.subr.mxu0 0.0
    %639 = vmatpush1.msra.mxu0 0.0
    %640 = vmatprep.subr.mxu0 0.0
    %641 = vmatpush1.msra.mxu0 0.0
    %642 = vmatprep.subr.mxu0 0.0
    %643 = vmatpush1.msra.mxu0 0.0
    %644 = vmatprep.subr.mxu0 0.0
    %645 = vmatpush1.msra.mxu0 0.0
    %646 = vmatprep.subr.mxu0 0.0
    %647 = vmatpush1.msra.mxu0 0.0
    %648 = vmatprep.subr.mxu0 0.0
    %649 = vmatpush1.msra.mxu0 0.0
    %650 = vmatprep.subr.mxu0 0.0
    %651 = vmatpush1.msra.mxu0 0.0
    %652 = vmatprep.mubr.f32.mxu0 0.0
    %653 = vmatmul.mubr.f32.gmra.mrb[0].mxu0 %v577
    %v654 = vpop.f32.mrb[0].mxu0
    %v655 = vadd.f32 %v574, %v654
    %v656 = vpop.f32.mrb[0].mxu0
    %657 = vmatprep.mubr.f32.mxu0 0.0
    %658 = vmatmul.mubr.f32.gmra.mrb[0].mxu0 %v580
    %v659 = vpop.f32.mrb[0].mxu0
    %v660 = vadd.f32 %v574, %v659
    %v661 = vpop.f32.mrb[0].mxu0
    %662 = vmatprep.mubr.f32.mxu0 0.0
    %663 = vmatmul.mubr.f32.gmra.mrb[0].mxu0 %v583
    %v664 = vpop.f32.mrb[0].mxu0
    %v665 = vadd.f32 %v574, %v664
    %v666 = vpop.f32.mrb[0].mxu0
    %667 = vmatprep.mubr.f32.mxu0 0.0
    %668 = vmatmul.mubr.f32.gmra.mrb[0].mxu0 %v586
    %v669 = vpop.f32.mrb[0].mxu0
    %v670 = vadd.f32 %v574, %v669
    %v671 = vpop.f32.mrb[0].mxu0
    %672 = vdwg.mxu0
    %vm673 = vcmp.gt.f32.partialorder %v655, 0.0
    %vm674 = vcmp.gt.f32.partialorder %v660, 0.0
    %vm675 = vcmp.gt.f32.partialorder %v665, 0.0
    %vm676 = vcmp.gt.f32.partialorder %v670, 0.0
    %v677 = vmul.f32 %v655, 0.2
    %v678 = vmul.f32 %v660, 0.2
    %v679 = vmul.f32 %v665, 0.2
    %v680 = vmul.f32 %v670, 0.2
    %v681 = vsel %vm673, %v655, %v677
    %v682 = vsel %vm674, %v660, %v678
    %v683 = vsel %vm675, %v665, %v679
    %v684 = vsel %vm676, %v670, %v680
    %v685 = vrot.slane %v681, 7
    %v686 = vrot.slane %v682, 7
    %v687 = vrot.slane %v683, 7
    %v688 = vrot.slane %v684, 7
    %v689 = vsel %vm270, %v687, %v688
    %v690 = vsel %vm270, %v686, %v687
    %v691 = vsel %vm270, %v685, %v686
    %v692 = vsel %vm270, %v688, %v685
    %v693 = vmul.f32 %v692, %v278
    %v694 = vmul.f32 %v691, %v283
    %v695 = vmul.f32 %v690, %v288
    %v696 = vmul.f32 %v689, %v293
    %v697 = vrot.slane %v681, 1
    %v698 = vrot.slane %v682, 1
    %v699 = vrot.slane %v683, 1
    %v700 = vrot.slane %v684, 1
    %v701 = vsel %vm303, %v699, %v700
    %v702 = vsel %vm303, %v698, %v699
    %v703 = vsel %vm303, %v697, %v698
    %v704 = vsel %vm303, %v700, %v697
    %v705 = vmul.f32 %v703, %v311
    %v706 = vmul.f32 %v702, %v316
    %v707 = vmul.f32 %v701, %v321
    %v708 = vmul.f32 %v704, %v326
    %713 = vrot.lane.b32.xlu0 %v681, 32
    %v714 = vpop.permute.xlu0 %713
    %715 = vrot.lane.b32.xlu0 %v682, 32
    %v716 = vpop.permute.xlu0 %715
    %717 = vrot.lane.b32.xlu0 %v683, 32
    %v718 = vpop.permute.xlu0 %717
    %719 = vrot.lane.b32.xlu0 %v684, 32
    %v720 = vpop.permute.xlu0 %719
    %729 = vrot.lane.b32.xlu0 %v705, 64
    %v730 = vpop.permute.xlu0 %729
    %731 = vrot.lane.b32.xlu0 %v706, 64
    %v732 = vpop.permute.xlu0 %731
    %733 = vrot.lane.b32.xlu0 %v707, 64
    %v734 = vpop.permute.xlu0 %733
    %735 = vrot.lane.b32.xlu0 %v708, 64
    %v736 = vpop.permute.xlu0 %735
    %v741 = vsel %vm369, %v693, %v714
    %v742 = vsel %vm369, %v694, %v716
    %v743 = vsel %vm369, %v695, %v718
    %v744 = vsel %vm369, %v696, %v720
    %v745 = vsel %vm554, %v741, %v730
    %v746 = vsel %vm554, %v742, %v732
    %v747 = vsel %vm554, %v743, %v734
    %v748 = vsel %vm554, %v744, %v736
    %v749 = vld [vmem:[%s1 + $0x1b0] sm:$0xff]
    %v750 = vld [vmem:[%s1 + $0x1b8] sm:$0xff]
    %v751 = vld [vmem:[%s1 + $0x1c0] sm:$0xff]
    %v752 = vld [vmem:[%s1 + $0x1c8] sm:$0xff]
    %v753 = vld [vmem:[%s1 + $0x1d0] sm:$0xff]
    %v754 = vld [vmem:[%s1 + $0x1d8] sm:$0xff]
    %v755 = vld [vmem:[%s1 + $0x1e0] sm:$0xff]
    %v756 = vld [vmem:[%s1 + $0x1e8] sm:$0xff]
    %v757 = vld [vmem:[%s1 + $0x1f0] sm:$0xff]
    %v758 = vld [vmem:[%s1 + $0x1f8] sm:$0xff]
    %v759 = vld [vmem:[%s1 + $0x200] sm:$0xff]
    %v760 = vld [vmem:[%s1 + $0x208] sm:$0xff]
    %v761 = vlaneseq
    %v762 = vshrl.u32 %v761, 7
    %v763 = vsub.s32 2, %v762
    %v764 = vrot.slane %v263, %v763
    %v766 = vsel %vm575, %v745, 0
    %v769 = vsel %vm575, %v746, 0
    %v772 = vsel %vm575, %v747, 0
    %v775 = vsel %vm575, %v748, 0
    %777 = vmatprep.subr.mxu0 0.0
    %778 = vmatpush1.msra.mxu0 %v749
    %779 = vmatprep.subr.mxu0 0.0
    %780 = vmatpush1.msra.mxu0 %v750
    %781 = vmatprep.subr.mxu0 0.0
    %782 = vmatpush1.msra.mxu0 %v751
    %783 = vmatprep.subr.mxu0 0.0
    %784 = vmatpush1.msra.mxu0 %v752
    %785 = vmatprep.subr.mxu0 0.0
    %786 = vmatpush1.msra.mxu0 %v753
    %787 = vmatprep.subr.mxu0 0.0
    %788 = vmatpush1.msra.mxu0 %v754
    %789 = vmatprep.subr.mxu0 0.0
    %790 = vmatpush1.msra.mxu0 %v755
    %791 = vmatprep.subr.mxu0 0.0
    %792 = vmatpush1.msra.mxu0 %v756
    %793 = vmatprep.subr.mxu0 0.0
    %794 = vmatpush1.msra.mxu0 %v757
    %795 = vmatprep.subr.mxu0 0.0
    %796 = vmatpush1.msra.mxu0 %v758
    %797 = vmatprep.subr.mxu0 0.0
    %798 = vmatpush1.msra.mxu0 %v759
    %799 = vmatprep.subr.mxu0 0.0
    %800 = vmatpush1.msra.mxu0 %v760
    %801 = vmatprep.subr.mxu0 0.0
    %802 = vmatpush1.msra.mxu0 0.0
    %803 = vmatprep.subr.mxu0 0.0
    %804 = vmatpush1.msra.mxu0 0.0
    %805 = vmatprep.subr.mxu0 0.0
    %806 = vmatpush1.msra.mxu0 0.0
    %807 = vmatprep.subr.mxu0 0.0
    %808 = vmatpush1.msra.mxu0 0.0
    %809 = vmatprep.subr.mxu0 0.0
    %810 = vmatpush1.msra.mxu0 0.0
    %811 = vmatprep.subr.mxu0 0.0
    %812 = vmatpush1.msra.mxu0 0.0
    %813 = vmatprep.subr.mxu0 0.0
    %814 = vmatpush1.msra.mxu0 0.0
    %815 = vmatprep.subr.mxu0 0.0
    %816 = vmatpush1.msra.mxu0 0.0
    %817 = vmatprep.subr.mxu0 0.0
    %818 = vmatpush1.msra.mxu0 0.0
    %819 = vmatprep.subr.mxu0 0.0
    %820 = vmatpush1.msra.mxu0 0.0
    %821 = vmatprep.subr.mxu0 0.0
    %822 = vmatpush1.msra.mxu0 0.0
    %823 = vmatprep.subr.mxu0 0.0
    %824 = vmatpush1.msra.mxu0 0.0
    %825 = vmatprep.subr.mxu0 0.0
    %826 = vmatpush1.msra.mxu0 0.0
    %827 = vmatprep.subr.mxu0 0.0
    %828 = vmatpush1.msra.mxu0 0.0
    %829 = vmatprep.subr.mxu0 0.0
    %830 = vmatpush1.msra.mxu0 0.0
    %831 = vmatprep.subr.mxu0 0.0
    %832 = vmatpush1.msra.mxu0 0.0
    %833 = vmatprep.subr.mxu0 0.0
    %834 = vmatpush1.msra.mxu0 0.0
    %835 = vmatprep.subr.mxu0 0.0
    %836 = vmatpush1.msra.mxu0 0.0
    %837 = vmatprep.subr.mxu0 0.0
    %838 = vmatpush1.msra.mxu0 0.0
    %839 = vmatprep.subr.mxu0 0.0
    %840 = vmatpush1.msra.mxu0 0.0
    %841 = vmatprep.mubr.f32.mxu0 0.0
    %842 = vmatmul.mubr.f32.gmra.mrb[0].mxu0 %v766
    %v843 = vpop.f32.mrb[0].mxu0
    %v844 = vadd.f32 %v764, %v843
    %v845 = vpop.f32.mrb[0].mxu0
    %846 = vmatprep.mubr.f32.mxu0 0.0
    %847 = vmatmul.mubr.f32.gmra.mrb[0].mxu0 %v769
    %v848 = vpop.f32.mrb[0].mxu0
    %v849 = vadd.f32 %v764, %v848
    %v850 = vpop.f32.mrb[0].mxu0
    %851 = vmatprep.mubr.f32.mxu0 0.0
    %852 = vmatmul.mubr.f32.gmra.mrb[0].mxu0 %v772
    %v853 = vpop.f32.mrb[0].mxu0
    %v854 = vadd.f32 %v764, %v853
    %v855 = vpop.f32.mrb[0].mxu0
    %856 = vmatprep.mubr.f32.mxu0 0.0
    %857 = vmatmul.mubr.f32.gmra.mrb[0].mxu0 %v775
    %v858 = vpop.f32.mrb[0].mxu0
    %v859 = vadd.f32 %v764, %v858
    %v860 = vpop.f32.mrb[0].mxu0
    %861 = vdwg.mxu0
    %vm862 = vcmp.gt.f32.partialorder %v844, 0.0
    %vm863 = vcmp.gt.f32.partialorder %v849, 0.0
    %vm864 = vcmp.gt.f32.partialorder %v854, 0.0
    %vm865 = vcmp.gt.f32.partialorder %v859, 0.0
    %v866 = vmul.f32 %v844, 0.2
    %v867 = vmul.f32 %v849, 0.2
    %v868 = vmul.f32 %v854, 0.2
    %v869 = vmul.f32 %v859, 0.2
    %v870 = vsel %vm862, %v844, %v866
    %v871 = vsel %vm863, %v849, %v867
    %v872 = vsel %vm864, %v854, %v868
    %v873 = vsel %vm865, %v859, %v869
    %v874 = vld [vmem:[%s1 + $0x210] sm:$0xff]
    %v875 = vld [vmem:[%s1 + $0x218] sm:$0xff]
    %v876 = vld [vmem:[%s1 + $0x220] sm:$0xff]
    %v877 = vld [vmem:[%s1 + $0x228] sm:$0xff]
    %v878 = vlaneseq
    %v879 = vshrl.u32 %v878, 7
    %v880 = vsub.s32 3, %v879
    %v881 = vrot.slane %v263, %v880
    %v883 = vsel %vm369, %v870, 0
    %v886 = vsel %vm369, %v871, 0
    %v889 = vsel %vm369, %v872, 0
    %v892 = vsel %vm369, %v873, 0
    %894 = vmatprep.subr.mxu0 0.0
    %895 = vmatpush1.msra.mxu0 %v874
    %896 = vmatprep.subr.mxu0 0.0
    %897 = vmatpush1.msra.mxu0 %v875
    %898 = vmatprep.subr.mxu0 0.0
    %899 = vmatpush1.msra.mxu0 %v876
    %900 = vmatprep.subr.mxu0 0.0
    %901 = vmatpush1.msra.mxu0 %v877
    %902 = vmatprep.subr.mxu0 0.0
    %903 = vmatpush1.msra.mxu0 0.0
    %904 = vmatprep.subr.mxu0 0.0
    %905 = vmatpush1.msra.mxu0 0.0
    %906 = vmatprep.subr.mxu0 0.0
    %907 = vmatpush1.msra.mxu0 0.0
    %908 = vmatprep.subr.mxu0 0.0
    %909 = vmatpush1.msra.mxu0 0.0
    %910 = vmatprep.subr.mxu0 0.0
    %911 = vmatpush1.msra.mxu0 0.0
    %912 = vmatprep.subr.mxu0 0.0
    %913 = vmatpush1.msra.mxu0 0.0
    %914 = vmatprep.subr.mxu0 0.0
    %915 = vmatpush1.msra.mxu0 0.0
    %916 = vmatprep.subr.mxu0 0.0
    %917 = vmatpush1.msra.mxu0 0.0
    %918 = vmatprep.subr.mxu0 0.0
    %919 = vmatpush1.msra.mxu0 0.0
    %920 = vmatprep.subr.mxu0 0.0
    %921 = vmatpush1.msra.mxu0 0.0
    %922 = vmatprep.subr.mxu0 0.0
    %923 = vmatpush1.msra.mxu0 0.0
    %924 = vmatprep.subr.mxu0 0.0
    %925 = vmatpush1.msra.mxu0 0.0
    %926 = vmatprep.subr.mxu0 0.0
    %927 = vmatpush1.msra.mxu0 0.0
    %928 = vmatprep.subr.mxu0 0.0
    %929 = vmatpush1.msra.mxu0 0.0
    %930 = vmatprep.subr.mxu0 0.0
    %931 = vmatpush1.msra.mxu0 0.0
    %932 = vmatprep.subr.mxu0 0.0
    %933 = vmatpush1.msra.mxu0 0.0
    %934 = vmatprep.subr.mxu0 0.0
    %935 = vmatpush1.msra.mxu0 0.0
    %936 = vmatprep.subr.mxu0 0.0
    %937 = vmatpush1.msra.mxu0 0.0
    %938 = vmatprep.subr.mxu0 0.0
    %939 = vmatpush1.msra.mxu0 0.0
    %940 = vmatprep.subr.mxu0 0.0
    %941 = vmatpush1.msra.mxu0 0.0
    %942 = vmatprep.subr.mxu0 0.0
    %943 = vmatpush1.msra.mxu0 0.0
    %944 = vmatprep.subr.mxu0 0.0
    %945 = vmatpush1.msra.mxu0 0.0
    %946 = vmatprep.subr.mxu0 0.0
    %947 = vmatpush1.msra.mxu0 0.0
    %948 = vmatprep.subr.mxu0 0.0
    %949 = vmatpush1.msra.mxu0 0.0
    %950 = vmatprep.subr.mxu0 0.0
    %951 = vmatpush1.msra.mxu0 0.0
    %952 = vmatprep.subr.mxu0 0.0
    %953 = vmatpush1.msra.mxu0 0.0
    %954 = vmatprep.subr.mxu0 0.0
    %955 = vmatpush1.msra.mxu0 0.0
    %956 = vmatprep.subr.mxu0 0.0
    %957 = vmatpush1.msra.mxu0 0.0
    %958 = vmatprep.mubr.f32.mxu0 0.0
    %959 = vmatmul.mubr.f32.gmra.mrb[0].mxu0 %v883
    %v960 = vpop.f32.mrb[0].mxu0
    %v961 = vadd.f32 %v881, %v960
    %v962 = vpop.f32.mrb[0].mxu0
    %963 = vmatprep.mubr.f32.mxu0 0.0
    %964 = vmatmul.mubr.f32.gmra.mrb[0].mxu0 %v886
    %v965 = vpop.f32.mrb[0].mxu0
    %v966 = vadd.f32 %v881, %v965
    %v967 = vpop.f32.mrb[0].mxu0
    %968 = vmatprep.mubr.f32.mxu0 0.0
    %969 = vmatmul.mubr.f32.gmra.mrb[0].mxu0 %v889
    %v970 = vpop.f32.mrb[0].mxu0
    %v971 = vadd.f32 %v881, %v970
    %v972 = vpop.f32.mrb[0].mxu0
    %973 = vmatprep.mubr.f32.mxu0 0.0
    %974 = vmatmul.mubr.f32.gmra.mrb[0].mxu0 %v892
    %v975 = vpop.f32.mrb[0].mxu0
    %v976 = vadd.f32 %v881, %v975
    %v977 = vpop.f32.mrb[0].mxu0
    %978 = vdwg.mxu0
    %v979 = vtanh.pop %v961
    %v980 = vtanh.pop %v966
    %v981 = vtanh.pop %v971
    %v982 = vtanh.pop %v976
    %v983 = vld [vmem:[%s1 + $0x230] sm:$0xff]
    %v984 = vlaneseq
    %v985 = vshrl.u32 %v984, 7
    %v986 = vsub.s32 4, %v985
    %v987 = vrot.slane %v263, %v986
    %vm988 = vcmask 64512
    %v990 = vsel %vm988, %v979, 0
    %v993 = vsel %vm988, %v980, 0
    %v996 = vsel %vm988, %v981, 0
    %v999 = vsel %vm988, %v982, 0
    %1001 = vmatprep.subr.mxu0 0.0
    %1002 = vmatpush1.msra.mxu0 %v983
    %1003 = vmatprep.subr.mxu0 0.0
    %1004 = vmatpush1.msra.mxu0 0.0
    %1005 = vmatprep.subr.mxu0 0.0
    %1006 = vmatpush1.msra.mxu0 0.0
    %1007 = vmatprep.subr.mxu0 0.0
    %1008 = vmatpush1.msra.mxu0 0.0
    %1009 = vmatprep.subr.mxu0 0.0
    %1010 = vmatpush1.msra.mxu0 0.0
    %1011 = vmatprep.subr.mxu0 0.0
    %1012 = vmatpush1.msra.mxu0 0.0
    %1013 = vmatprep.subr.mxu0 0.0
    %1014 = vmatpush1.msra.mxu0 0.0
    %1015 = vmatprep.subr.mxu0 0.0
    %1016 = vmatpush1.msra.mxu0 0.0
    %1017 = vmatprep.subr.mxu0 0.0
    %1018 = vmatpush1.msra.mxu0 0.0
    %1019 = vmatprep.subr.mxu0 0.0
    %1020 = vmatpush1.msra.mxu0 0.0
    %1021 = vmatprep.subr.mxu0 0.0
    %1022 = vmatpush1.msra.mxu0 0.0
    %1023 = vmatprep.subr.mxu0 0.0
    %1024 = vmatpush1.msra.mxu0 0.0
    %1025 = vmatprep.subr.mxu0 0.0
    %1026 = vmatpush1.msra.mxu0 0.0
    %1027 = vmatprep.subr.mxu0 0.0
    %1028 = vmatpush1.msra.mxu0 0.0
    %1029 = vmatprep.subr.mxu0 0.0
    %1030 = vmatpush1.msra.mxu0 0.0
    %1031 = vmatprep.subr.mxu0 0.0
    %1032 = vmatpush1.msra.mxu0 0.0
    %1033 = vmatprep.subr.mxu0 0.0
    %1034 = vmatpush1.msra.mxu0 0.0
    %1035 = vmatprep.subr.mxu0 0.0
    %1036 = vmatpush1.msra.mxu0 0.0
    %1037 = vmatprep.subr.mxu0 0.0
    %1038 = vmatpush1.msra.mxu0 0.0
    %1039 = vmatprep.subr.mxu0 0.0
    %1040 = vmatpush1.msra.mxu0 0.0
    %1041 = vmatprep.subr.mxu0 0.0
    %1042 = vmatpush1.msra.mxu0 0.0
    %1043 = vmatprep.subr.mxu0 0.0
    %1044 = vmatpush1.msra.mxu0 0.0
    %1045 = vmatprep.subr.mxu0 0.0
    %1046 = vmatpush1.msra.mxu0 0.0
    %1047 = vmatprep.subr.mxu0 0.0
    %1048 = vmatpush1.msra.mxu0 0.0
    %1049 = vmatprep.subr.mxu0 0.0
    %1050 = vmatpush1.msra.mxu0 0.0
    %1051 = vmatprep.subr.mxu0 0.0
    %1052 = vmatpush1.msra.mxu0 0.0
    %1053 = vmatprep.subr.mxu0 0.0
    %1054 = vmatpush1.msra.mxu0 0.0
    %1055 = vmatprep.subr.mxu0 0.0
    %1056 = vmatpush1.msra.mxu0 0.0
    %1057 = vmatprep.subr.mxu0 0.0
    %1058 = vmatpush1.msra.mxu0 0.0
    %1059 = vmatprep.subr.mxu0 0.0
    %1060 = vmatpush1.msra.mxu0 0.0
    %1061 = vmatprep.subr.mxu0 0.0
    %1062 = vmatpush1.msra.mxu0 0.0
    %1063 = vmatprep.subr.mxu0 0.0
    %1064 = vmatpush1.msra.mxu0 0.0
    %1065 = vmatprep.mubr.f32.mxu0 0.0
    %1066 = vmatmul.mubr.f32.gmra.mrb[0].mxu0 %v990
    %v1067 = vpop.f32.mrb[0].mxu0
    %v1068 = vadd.f32 %v987, %v1067
    %v1069 = vpop.f32.mrb[0].mxu0
    %1070 = vmatprep.mubr.f32.mxu0 0.0
    %1071 = vmatmul.mubr.f32.gmra.mrb[0].mxu0 %v993
    %v1072 = vpop.f32.mrb[0].mxu0
    %v1073 = vadd.f32 %v987, %v1072
    %v1074 = vpop.f32.mrb[0].mxu0
    %1075 = vmatprep.mubr.f32.mxu0 0.0
    %1076 = vmatmul.mubr.f32.gmra.mrb[0].mxu0 %v996
    %v1077 = vpop.f32.mrb[0].mxu0
    %v1078 = vadd.f32 %v987, %v1077
    %v1079 = vpop.f32.mrb[0].mxu0
    %1080 = vmatprep.mubr.f32.mxu0 0.0
    %1081 = vmatmul.mubr.f32.gmra.mrb[0].mxu0 %v999
    %v1082 = vpop.f32.mrb[0].mxu0
    %v1083 = vadd.f32 %v987, %v1082
    %v1084 = vpop.f32.mrb[0].mxu0
    %1085 = vdwg.mxu0
    %vm1086 = vcmp.gt.f32.partialorder %v1068, 0.0
    %vm1087 = vcmp.gt.f32.partialorder %v1073, 0.0
    %vm1088 = vcmp.gt.f32.partialorder %v1078, 0.0
    %vm1089 = vcmp.gt.f32.partialorder %v1083, 0.0
    %v1090 = vmul.f32 %v1068, 0.2
    %v1091 = vmul.f32 %v1073, 0.2
    %v1092 = vmul.f32 %v1078, 0.2
    %v1093 = vmul.f32 %v1083, 0.2
    %v1094 = vsel %vm1086, %v1068, %v1090
    %v1095 = vsel %vm1087, %v1073, %v1091
    %v1096 = vsel %vm1088, %v1078, %v1092
    %v1097 = vsel %vm1089, %v1083, %v1093
    %v1098 = vrot.slane %v1094, 7
    %v1099 = vrot.slane %v1095, 7
    %v1100 = vrot.slane %v1096, 7
    %v1101 = vrot.slane %v1097, 7
    %v1102 = vsel %vm270, %v1100, %v1101
    %v1103 = vsel %vm270, %v1099, %v1100
    %v1104 = vsel %vm270, %v1098, %v1099
    %v1105 = vsel %vm270, %v1101, %v1098
    %v1106 = vmul.f32 %v1105, %v278
    %v1107 = vmul.f32 %v1104, %v283
    %v1108 = vmul.f32 %v1103, %v288
    %v1109 = vmul.f32 %v1102, %v293
    %v1110 = vrot.slane %v1094, 1
    %v1111 = vrot.slane %v1095, 1
    %v1112 = vrot.slane %v1096, 1
    %v1113 = vrot.slane %v1097, 1
    %v1114 = vsel %vm303, %v1112, %v1113
    %v1115 = vsel %vm303, %v1111, %v1112
    %v1116 = vsel %vm303, %v1110, %v1111
    %v1117 = vsel %vm303, %v1113, %v1110
    %v1118 = vmul.f32 %v1116, %v311
    %v1119 = vmul.f32 %v1115, %v316
    %v1120 = vmul.f32 %v1114, %v321
    %v1121 = vmul.f32 %v1117, %v326
    %1126 = vrot.lane.b32.xlu0 %v1094, 32
    %v1127 = vpop.permute.xlu0 %1126
    %1128 = vrot.lane.b32.xlu0 %v1095, 32
    %v1129 = vpop.permute.xlu0 %1128
    %1130 = vrot.lane.b32.xlu0 %v1096, 32
    %v1131 = vpop.permute.xlu0 %1130
    %1132 = vrot.lane.b32.xlu0 %v1097, 32
    %v1133 = vpop.permute.xlu0 %1132
    %1142 = vrot.lane.b32.xlu0 %v1118, 64
    %v1143 = vpop.permute.xlu0 %1142
    %1144 = vrot.lane.b32.xlu0 %v1119, 64
    %v1145 = vpop.permute.xlu0 %1144
    %1146 = vrot.lane.b32.xlu0 %v1120, 64
    %v1147 = vpop.permute.xlu0 %1146
    %1148 = vrot.lane.b32.xlu0 %v1121, 64
    %v1149 = vpop.permute.xlu0 %1148
    %v1154 = vsel %vm369, %v1106, %v1127
    %v1155 = vsel %vm369, %v1107, %v1129
    %v1156 = vsel %vm369, %v1108, %v1131
    %v1157 = vsel %vm369, %v1109, %v1133
    %v1158 = vsel %vm554, %v1154, %v1143
    %v1159 = vsel %vm554, %v1155, %v1145
    %v1160 = vsel %vm554, %v1156, %v1147
    %v1161 = vsel %vm554, %v1157, %v1149
    %v1162 = vld [vmem:[%s1 + $0x238] sm:$0xff]
    %v1163 = vld [vmem:[%s1 + $0x240] sm:$0xff]
    %v1164 = vld [vmem:[%s1 + $0x248] sm:$0xff]
    %v1165 = vld [vmem:[%s1 + $0x250] sm:$0xff]
    %v1166 = vld [vmem:[%s1 + $0x258] sm:$0xff]
    %v1167 = vld [vmem:[%s1 + $0x260] sm:$0xff]
    %v1168 = vld [vmem:[%s1 + $0x268] sm:$0xff]
    %v1169 = vld [vmem:[%s1 + $0x270] sm:$0xff]
    %v1170 = vld [vmem:[%s1 + $0x278] sm:$0xff]
    %v1171 = vld [vmem:[%s1 + $0x280] sm:$0xff]
    %v1172 = vld [vmem:[%s1 + $0x288] sm:$0xff]
    %v1173 = vld [vmem:[%s1 + $0x290] sm:$0xff]
    %v1174 = vlaneseq
    %v1175 = vshrl.u32 %v1174, 7
    %v1176 = vsub.s32 5, %v1175
    %v1177 = vrot.slane %v263, %v1176
    %v1179 = vsel %vm575, %v1158, 0
    %v1182 = vsel %vm575, %v1159, 0
    %v1185 = vsel %vm575, %v1160, 0
    %v1188 = vsel %vm575, %v1161, 0
    %1190 = vmatprep.subr.mxu0 0.0
    %1191 = vmatpush1.msra.mxu0 %v1162
    %1192 = vmatprep.subr.mxu0 0.0
    %1193 = vmatpush1.msra.mxu0 %v1163
    %1194 = vmatprep.subr.mxu0 0.0
    %1195 = vmatpush1.msra.mxu0 %v1164
    %1196 = vmatprep.subr.mxu0 0.0
    %1197 = vmatpush1.msra.mxu0 %v1165
    %1198 = vmatprep.subr.mxu0 0.0
    %1199 = vmatpush1.msra.mxu0 %v1166
    %1200 = vmatprep.subr.mxu0 0.0
    %1201 = vmatpush1.msra.mxu0 %v1167
    %1202 = vmatprep.subr.mxu0 0.0
    %1203 = vmatpush1.msra.mxu0 %v1168
    %1204 = vmatprep.subr.mxu0 0.0
    %1205 = vmatpush1.msra.mxu0 %v1169
    %1206 = vmatprep.subr.mxu0 0.0
    %1207 = vmatpush1.msra.mxu0 %v1170
    %1208 = vmatprep.subr.mxu0 0.0
    %1209 = vmatpush1.msra.mxu0 %v1171
    %1210 = vmatprep.subr.mxu0 0.0
    %1211 = vmatpush1.msra.mxu0 %v1172
    %1212 = vmatprep.subr.mxu0 0.0
    %1213 = vmatpush1.msra.mxu0 %v1173
    %1214 = vmatprep.subr.mxu0 0.0
    %1215 = vmatpush1.msra.mxu0 0.0
    %1216 = vmatprep.subr.mxu0 0.0
    %1217 = vmatpush1.msra.mxu0 0.0
    %1218 = vmatprep.subr.mxu0 0.0
    %1219 = vmatpush1.msra.mxu0 0.0
    %1220 = vmatprep.subr.mxu0 0.0
    %1221 = vmatpush1.msra.mxu0 0.0
    %1222 = vmatprep.subr.mxu0 0.0
    %1223 = vmatpush1.msra.mxu0 0.0
    %1224 = vmatprep.subr.mxu0 0.0
    %1225 = vmatpush1.msra.mxu0 0.0
    %1226 = vmatprep.subr.mxu0 0.0
    %1227 = vmatpush1.msra.mxu0 0.0
    %1228 = vmatprep.subr.mxu0 0.0
    %1229 = vmatpush1.msra.mxu0 0.0
    %1230 = vmatprep.subr.mxu0 0.0
    %1231 = vmatpush1.msra.mxu0 0.0
    %1232 = vmatprep.subr.mxu0 0.0
    %1233 = vmatpush1.msra.mxu0 0.0
    %1234 = vmatprep.subr.mxu0 0.0
    %1235 = vmatpush1.msra.mxu0 0.0
    %1236 = vmatprep.subr.mxu0 0.0
    %1237 = vmatpush1.msra.mxu0 0.0
    %1238 = vmatprep.subr.mxu0 0.0
    %1239 = vmatpush1.msra.mxu0 0.0
    %1240 = vmatprep.subr.mxu0 0.0
    %1241 = vmatpush1.msra.mxu0 0.0
    %1242 = vmatprep.subr.mxu0 0.0
    %1243 = vmatpush1.msra.mxu0 0.0
    %1244 = vmatprep.subr.mxu0 0.0
    %1245 = vmatpush1.msra.mxu0 0.0
    %1246 = vmatprep.subr.mxu0 0.0
    %1247 = vmatpush1.msra.mxu0 0.0
    %1248 = vmatprep.subr.mxu0 0.0
    %1249 = vmatpush1.msra.mxu0 0.0
    %1250 = vmatprep.subr.mxu0 0.0
    %1251 = vmatpush1.msra.mxu0 0.0
    %1252 = vmatprep.subr.mxu0 0.0
    %1253 = vmatpush1.msra.mxu0 0.0
    %1254 = vmatprep.mubr.f32.mxu0 0.0
    %1255 = vmatmul.mubr.f32.gmra.mrb[0].mxu0 %v1179
    %v1256 = vpop.f32.mrb[0].mxu0
    %v1257 = vadd.f32 %v1177, %v1256
    %v1258 = vpop.f32.mrb[0].mxu0
    %1259 = vmatprep.mubr.f32.mxu0 0.0
    %1260 = vmatmul.mubr.f32.gmra.mrb[0].mxu0 %v1182
    %v1261 = vpop.f32.mrb[0].mxu0
    %v1262 = vadd.f32 %v1177, %v1261
    %v1263 = vpop.f32.mrb[0].mxu0
    %1264 = vmatprep.mubr.f32.mxu0 0.0
    %1265 = vmatmul.mubr.f32.gmra.mrb[0].mxu0 %v1185
    %v1266 = vpop.f32.mrb[0].mxu0
    %v1267 = vadd.f32 %v1177, %v1266
    %v1268 = vpop.f32.mrb[0].mxu0
    %1269 = vmatprep.mubr.f32.mxu0 0.0
    %1270 = vmatmul.mubr.f32.gmra.mrb[0].mxu0 %v1188
    %v1271 = vpop.f32.mrb[0].mxu0
    %v1272 = vadd.f32 %v1177, %v1271
    %v1273 = vpop.f32.mrb[0].mxu0
    %1274 = vdwg.mxu0
    %vm1275 = vcmp.gt.f32.partialorder %v1257, 0.0
    %vm1276 = vcmp.gt.f32.partialorder %v1262, 0.0
    %vm1277 = vcmp.gt.f32.partialorder %v1267, 0.0
    %vm1278 = vcmp.gt.f32.partialorder %v1272, 0.0
    %v1279 = vmul.f32 %v1257, 0.2
    %v1280 = vmul.f32 %v1262, 0.2
    %v1281 = vmul.f32 %v1267, 0.2
    %v1282 = vmul.f32 %v1272, 0.2
    %v1283 = vsel %vm1275, %v1257, %v1279
    %v1284 = vsel %vm1276, %v1262, %v1280
    %v1285 = vsel %vm1277, %v1267, %v1281
    %v1286 = vsel %vm1278, %v1272, %v1282
    %v1287 = vrot.slane %v1283, 7
    %v1288 = vrot.slane %v1284, 7
    %v1289 = vrot.slane %v1285, 7
    %v1290 = vrot.slane %v1286, 7
    %v1291 = vsel %vm270, %v1289, %v1290
    %v1292 = vsel %vm270, %v1288, %v1289
    %v1293 = vsel %vm270, %v1287, %v1288
    %v1294 = vsel %vm270, %v1290, %v1287
    %v1295 = vmul.f32 %v1294, %v278
    %v1296 = vmul.f32 %v1293, %v283
    %v1297 = vmul.f32 %v1292, %v288
    %v1298 = vmul.f32 %v1291, %v293
    %v1299 = vrot.slane %v1283, 1
    %v1300 = vrot.slane %v1284, 1
    %v1301 = vrot.slane %v1285, 1
    %v1302 = vrot.slane %v1286, 1
    %v1303 = vsel %vm303, %v1301, %v1302
    %v1304 = vsel %vm303, %v1300, %v1301
    %v1305 = vsel %vm303, %v1299, %v1300
    %v1306 = vsel %vm303, %v1302, %v1299
    %v1307 = vmul.f32 %v1305, %v311
    %v1308 = vmul.f32 %v1304, %v316
    %v1309 = vmul.f32 %v1303, %v321
    %v1310 = vmul.f32 %v1306, %v326
    %1315 = vrot.lane.b32.xlu0 %v1283, 32
    %v1316 = vpop.permute.xlu0 %1315
    %1317 = vrot.lane.b32.xlu0 %v1284, 32
    %v1318 = vpop.permute.xlu0 %1317
    %1319 = vrot.lane.b32.xlu0 %v1285, 32
    %v1320 = vpop.permute.xlu0 %1319
    %1321 = vrot.lane.b32.xlu0 %v1286, 32
    %v1322 = vpop.permute.xlu0 %1321
    %1331 = vrot.lane.b32.xlu0 %v1307, 64
    %v1332 = vpop.permute.xlu0 %1331
    %1333 = vrot.lane.b32.xlu0 %v1308, 64
    %v1334 = vpop.permute.xlu0 %1333
    %1335 = vrot.lane.b32.xlu0 %v1309, 64
    %v1336 = vpop.permute.xlu0 %1335
    %1337 = vrot.lane.b32.xlu0 %v1310, 64
    %v1338 = vpop.permute.xlu0 %1337
    %v1343 = vsel %vm369, %v1295, %v1316
    %v1344 = vsel %vm369, %v1296, %v1318
    %v1345 = vsel %vm369, %v1297, %v1320
    %v1346 = vsel %vm369, %v1298, %v1322
    %v1347 = vsel %vm554, %v1343, %v1332
    %v1348 = vsel %vm554, %v1344, %v1334
    %v1349 = vsel %vm554, %v1345, %v1336
    %v1350 = vsel %vm554, %v1346, %v1338
    %v1351 = vld [vmem:[%s1 + $0x298] sm:$0xff]
    %v1352 = vld [vmem:[%s1 + $0x2a0] sm:$0xff]
    %v1353 = vld [vmem:[%s1 + $0x2a8] sm:$0xff]
    %v1354 = vld [vmem:[%s1 + $0x2b0] sm:$0xff]
    %v1355 = vld [vmem:[%s1 + $0x2b8] sm:$0xff]
    %v1356 = vld [vmem:[%s1 + $0x2c0] sm:$0xff]
    %v1357 = vld [vmem:[%s1 + $0x2c8] sm:$0xff]
    %v1358 = vld [vmem:[%s1 + $0x2d0] sm:$0xff]
    %v1359 = vld [vmem:[%s1 + $0x2d8] sm:$0xff]
    %v1360 = vld [vmem:[%s1 + $0x2e0] sm:$0xff]
    %v1361 = vld [vmem:[%s1 + $0x2e8] sm:$0xff]
    %v1362 = vld [vmem:[%s1 + $0x2f0] sm:$0xff]
    %v1363 = vlaneseq
    %v1364 = vshrl.u32 %v1363, 7
    %v1365 = vsub.s32 6, %v1364
    %v1366 = vrot.slane %v263, %v1365
    %v1368 = vsel %vm575, %v1347, 0
    %v1371 = vsel %vm575, %v1348, 0
    %v1374 = vsel %vm575, %v1349, 0
    %v1377 = vsel %vm575, %v1350, 0
    %1379 = vmatprep.subr.mxu0 0.0
    %1380 = vmatpush1.msra.mxu0 %v1351
    %1381 = vmatprep.subr.mxu0 0.0
    %1382 = vmatpush1.msra.mxu0 %v1352
    %1383 = vmatprep.subr.mxu0 0.0
    %1384 = vmatpush1.msra.mxu0 %v1353
    %1385 = vmatprep.subr.mxu0 0.0
    %1386 = vmatpush1.msra.mxu0 %v1354
    %1387 = vmatprep.subr.mxu0 0.0
    %1388 = vmatpush1.msra.mxu0 %v1355
    %1389 = vmatprep.subr.mxu0 0.0
    %1390 = vmatpush1.msra.mxu0 %v1356
    %1391 = vmatprep.subr.mxu0 0.0
    %1392 = vmatpush1.msra.mxu0 %v1357
    %1393 = vmatprep.subr.mxu0 0.0
    %1394 = vmatpush1.msra.mxu0 %v1358
    %1395 = vmatprep.subr.mxu0 0.0
    %1396 = vmatpush1.msra.mxu0 %v1359
    %1397 = vmatprep.subr.mxu0 0.0
    %1398 = vmatpush1.msra.mxu0 %v1360
    %1399 = vmatprep.subr.mxu0 0.0
    %1400 = vmatpush1.msra.mxu0 %v1361
    %1401 = vmatprep.subr.mxu0 0.0
    %1402 = vmatpush1.msra.mxu0 %v1362
    %1403 = vmatprep.subr.mxu0 0.0
    %1404 = vmatpush1.msra.mxu0 0.0
    %1405 = vmatprep.subr.mxu0 0.0
    %1406 = vmatpush1.msra.mxu0 0.0
    %1407 = vmatprep.subr.mxu0 0.0
    %1408 = vmatpush1.msra.mxu0 0.0
    %1409 = vmatprep.subr.mxu0 0.0
    %1410 = vmatpush1.msra.mxu0 0.0
    %1411 = vmatprep.subr.mxu0 0.0
    %1412 = vmatpush1.msra.mxu0 0.0
    %1413 = vmatprep.subr.mxu0 0.0
    %1414 = vmatpush1.msra.mxu0 0.0
    %1415 = vmatprep.subr.mxu0 0.0
    %1416 = vmatpush1.msra.mxu0 0.0
    %1417 = vmatprep.subr.mxu0 0.0
    %1418 = vmatpush1.msra.mxu0 0.0
    %1419 = vmatprep.subr.mxu0 0.0
    %1420 = vmatpush1.msra.mxu0 0.0
    %1421 = vmatprep.subr.mxu0 0.0
    %1422 = vmatpush1.msra.mxu0 0.0
    %1423 = vmatprep.subr.mxu0 0.0
    %1424 = vmatpush1.msra.mxu0 0.0
    %1425 = vmatprep.subr.mxu0 0.0
    %1426 = vmatpush1.msra.mxu0 0.0
    %1427 = vmatprep.subr.mxu0 0.0
    %1428 = vmatpush1.msra.mxu0 0.0
    %1429 = vmatprep.subr.mxu0 0.0
    %1430 = vmatpush1.msra.mxu0 0.0
    %1431 = vmatprep.subr.mxu0 0.0
    %1432 = vmatpush1.msra.mxu0 0.0
    %1433 = vmatprep.subr.mxu0 0.0
    %1434 = vmatpush1.msra.mxu0 0.0
    %1435 = vmatprep.subr.mxu0 0.0
    %1436 = vmatpush1.msra.mxu0 0.0
    %1437 = vmatprep.subr.mxu0 0.0
    %1438 = vmatpush1.msra.mxu0 0.0
    %1439 = vmatprep.subr.mxu0 0.0
    %1440 = vmatpush1.msra.mxu0 0.0
    %1441 = vmatprep.subr.mxu0 0.0
    %1442 = vmatpush1.msra.mxu0 0.0
    %1443 = vmatprep.mubr.f32.mxu0 0.0
    %1444 = vmatmul.mubr.f32.gmra.mrb[0].mxu0 %v1368
    %v1445 = vpop.f32.mrb[0].mxu0
    %v1446 = vadd.f32 %v1366, %v1445
    %v1447 = vpop.f32.mrb[0].mxu0
    %1448 = vmatprep.mubr.f32.mxu0 0.0
    %1449 = vmatmul.mubr.f32.gmra.mrb[0].mxu0 %v1371
    %v1450 = vpop.f32.mrb[0].mxu0
    %v1451 = vadd.f32 %v1366, %v1450
    %v1452 = vpop.f32.mrb[0].mxu0
    %1453 = vmatprep.mubr.f32.mxu0 0.0
    %1454 = vmatmul.mubr.f32.gmra.mrb[0].mxu0 %v1374
    %v1455 = vpop.f32.mrb[0].mxu0
    %v1456 = vadd.f32 %v1366, %v1455
    %v1457 = vpop.f32.mrb[0].mxu0
    %1458 = vmatprep.mubr.f32.mxu0 0.0
    %1459 = vmatmul.mubr.f32.gmra.mrb[0].mxu0 %v1377
    %v1460 = vpop.f32.mrb[0].mxu0
    %v1461 = vadd.f32 %v1366, %v1460
    %v1462 = vpop.f32.mrb[0].mxu0
    %1463 = vdwg.mxu0
    %vm1464 = vcmp.gt.f32.partialorder %v1446, 0.0
    %vm1465 = vcmp.gt.f32.partialorder %v1451, 0.0
    %vm1466 = vcmp.gt.f32.partialorder %v1456, 0.0
    %vm1467 = vcmp.gt.f32.partialorder %v1461, 0.0
    %v1468 = vmul.f32 %v1446, 0.2
    %v1469 = vmul.f32 %v1451, 0.2
    %v1470 = vmul.f32 %v1456, 0.2
    %v1471 = vmul.f32 %v1461, 0.2
    %v1472 = vsel %vm1464, %v1446, %v1468
    %v1473 = vsel %vm1465, %v1451, %v1469
    %v1474 = vsel %vm1466, %v1456, %v1470
    %v1475 = vsel %vm1467, %v1461, %v1471
    %v1476 = vrot.slane %v1472, 7
    %v1477 = vrot.slane %v1473, 7
    %v1478 = vrot.slane %v1474, 7
    %v1479 = vrot.slane %v1475, 7
    %v1480 = vsel %vm270, %v1478, %v1479
    %v1481 = vsel %vm270, %v1477, %v1478
    %v1482 = vsel %vm270, %v1476, %v1477
    %v1483 = vsel %vm270, %v1479, %v1476
    %v1484 = vmul.f32 %v1483, %v278
    %v1485 = vmul.f32 %v1482, %v283
    %v1486 = vmul.f32 %v1481, %v288
    %v1487 = vmul.f32 %v1480, %v293
    %v1488 = vrot.slane %v1472, 1
    %v1489 = vrot.slane %v1473, 1
    %v1490 = vrot.slane %v1474, 1
    %v1491 = vrot.slane %v1475, 1
    %v1492 = vsel %vm303, %v1490, %v1491
    %v1493 = vsel %vm303, %v1489, %v1490
    %v1494 = vsel %vm303, %v1488, %v1489
    %v1495 = vsel %vm303, %v1491, %v1488
    %v1496 = vmul.f32 %v1494, %v311
    %v1497 = vmul.f32 %v1493, %v316
    %v1498 = vmul.f32 %v1492, %v321
    %v1499 = vmul.f32 %v1495, %v326
    %1504 = vrot.lane.b32.xlu0 %v1472, 32
    %v1505 = vpop.permute.xlu0 %1504
    %1506 = vrot.lane.b32.xlu0 %v1473, 32
    %v1507 = vpop.permute.xlu0 %1506
    %1508 = vrot.lane.b32.xlu0 %v1474, 32
    %v1509 = vpop.permute.xlu0 %1508
    %1510 = vrot.lane.b32.xlu0 %v1475, 32
    %v1511 = vpop.permute.xlu0 %1510
    %1520 = vrot.lane.b32.xlu0 %v1496, 64
    %v1521 = vpop.permute.xlu0 %1520
    %1522 = vrot.lane.b32.xlu0 %v1497, 64
    %v1523 = vpop.permute.xlu0 %1522
    %1524 = vrot.lane.b32.xlu0 %v1498, 64
    %v1525 = vpop.permute.xlu0 %1524
    %1526 = vrot.lane.b32.xlu0 %v1499, 64
    %v1527 = vpop.permute.xlu0 %1526
    %v1532 = vsel %vm369, %v1484, %v1505
    %v1533 = vsel %vm369, %v1485, %v1507
    %v1534 = vsel %vm369, %v1486, %v1509
    %v1535 = vsel %vm369, %v1487, %v1511
    %v1536 = vsel %vm554, %v1532, %v1521
    %v1537 = vsel %vm554, %v1533, %v1523
    %v1538 = vsel %vm554, %v1534, %v1525
    %v1539 = vsel %vm554, %v1535, %v1527
    %v1540 = vld [vmem:[%s1 + $0x2f8] sm:$0xff]
    %v1541 = vld [vmem:[%s1 + $0x300] sm:$0xff]
    %v1542 = vld [vmem:[%s1 + $0x308] sm:$0xff]
    %v1543 = vld [vmem:[%s1 + $0x310] sm:$0xff]
    %v1544 = vld [vmem:[%s1 + $0x318] sm:$0xff]
    %v1545 = vld [vmem:[%s1 + $0x320] sm:$0xff]
    %v1546 = vld [vmem:[%s1 + $0x328] sm:$0xff]
    %v1547 = vld [vmem:[%s1 + $0x330] sm:$0xff]
    %v1548 = vld [vmem:[%s1 + $0x338] sm:$0xff]
    %v1549 = vld [vmem:[%s1 + $0x340] sm:$0xff]
    %v1550 = vld [vmem:[%s1 + $0x348] sm:$0xff]
    %v1551 = vld [vmem:[%s1 + $0x350] sm:$0xff]
    %v1552 = vlaneseq
    %v1553 = vshrl.u32 %v1552, 7
    %v1554 = vsub.s32 7, %v1553
    %v1555 = vrot.slane %v263, %v1554
    %v1557 = vsel %vm575, %v1536, 0
    %v1560 = vsel %vm575, %v1537, 0
    %v1563 = vsel %vm575, %v1538, 0
    %v1566 = vsel %vm575, %v1539, 0
    %1568 = vmatprep.subr.mxu0 0.0
    %1569 = vmatpush1.msra.mxu0 %v1540
    %1570 = vmatprep.subr.mxu0 0.0
    %1571 = vmatpush1.msra.mxu0 %v1541
    %1572 = vmatprep.subr.mxu0 0.0
    %1573 = vmatpush1.msra.mxu0 %v1542
    %1574 = vmatprep.subr.mxu0 0.0
    %1575 = vmatpush1.msra.mxu0 %v1543
    %1576 = vmatprep.subr.mxu0 0.0
    %1577 = vmatpush1.msra.mxu0 %v1544
    %1578 = vmatprep.subr.mxu0 0.0
    %1579 = vmatpush1.msra.mxu0 %v1545
    %1580 = vmatprep.subr.mxu0 0.0
    %1581 = vmatpush1.msra.mxu0 %v1546
    %1582 = vmatprep.subr.mxu0 0.0
    %1583 = vmatpush1.msra.mxu0 %v1547
    %1584 = vmatprep.subr.mxu0 0.0
    %1585 = vmatpush1.msra.mxu0 %v1548
    %1586 = vmatprep.subr.mxu0 0.0
    %1587 = vmatpush1.msra.mxu0 %v1549
    %1588 = vmatprep.subr.mxu0 0.0
    %1589 = vmatpush1.msra.mxu0 %v1550
    %1590 = vmatprep.subr.mxu0 0.0
    %1591 = vmatpush1.msra.mxu0 %v1551
    %1592 = vmatprep.subr.mxu0 0.0
    %1593 = vmatpush1.msra.mxu0 0.0
    %1594 = vmatprep.subr.mxu0 0.0
    %1595 = vmatpush1.msra.mxu0 0.0
    %1596 = vmatprep.subr.mxu0 0.0
    %1597 = vmatpush1.msra.mxu0 0.0
    %1598 = vmatprep.subr.mxu0 0.0
    %1599 = vmatpush1.msra.mxu0 0.0
    %1600 = vmatprep.subr.mxu0 0.0
    %1601 = vmatpush1.msra.mxu0 0.0
    %1602 = vmatprep.subr.mxu0 0.0
    %1603 = vmatpush1.msra.mxu0 0.0
    %1604 = vmatprep.subr.mxu0 0.0
    %1605 = vmatpush1.msra.mxu0 0.0
    %1606 = vmatprep.subr.mxu0 0.0
    %1607 = vmatpush1.msra.mxu0 0.0
    %1608 = vmatprep.subr.mxu0 0.0
    %1609 = vmatpush1.msra.mxu0 0.0
    %1610 = vmatprep.subr.mxu0 0.0
    %1611 = vmatpush1.msra.mxu0 0.0
    %1612 = vmatprep.subr.mxu0 0.0
    %1613 = vmatpush1.msra.mxu0 0.0
    %1614 = vmatprep.subr.mxu0 0.0
    %1615 = vmatpush1.msra.mxu0 0.0
    %1616 = vmatprep.subr.mxu0 0.0
    %1617 = vmatpush1.msra.mxu0 0.0
    %1618 = vmatprep.subr.mxu0 0.0
    %1619 = vmatpush1.msra.mxu0 0.0
    %1620 = vmatprep.subr.mxu0 0.0
    %1621 = vmatpush1.msra.mxu0 0.0
    %1622 = vmatprep.subr.mxu0 0.0
    %1623 = vmatpush1.msra.mxu0 0.0
    %1624 = vmatprep.subr.mxu0 0.0
    %1625 = vmatpush1.msra.mxu0 0.0
    %1626 = vmatprep.subr.mxu0 0.0
    %1627 = vmatpush1.msra.mxu0 0.0
    %1628 = vmatprep.subr.mxu0 0.0
    %1629 = vmatpush1.msra.mxu0 0.0
    %1630 = vmatprep.subr.mxu0 0.0
    %1631 = vmatpush1.msra.mxu0 0.0
    %1632 = vmatprep.mubr.f32.mxu0 0.0
    %1633 = vmatmul.mubr.f32.gmra.mrb[0].mxu0 %v1557
    %v1634 = vpop.f32.mrb[0].mxu0
    %v1635 = vadd.f32 %v1555, %v1634
    %v1636 = vpop.f32.mrb[0].mxu0
    %1637 = vmatprep.mubr.f32.mxu0 0.0
    %1638 = vmatmul.mubr.f32.gmra.mrb[0].mxu0 %v1560
    %v1639 = vpop.f32.mrb[0].mxu0
    %v1640 = vadd.f32 %v1555, %v1639
    %v1641 = vpop.f32.mrb[0].mxu0
    %1642 = vmatprep.mubr.f32.mxu0 0.0
    %1643 = vmatmul.mubr.f32.gmra.mrb[0].mxu0 %v1563
    %v1644 = vpop.f32.mrb[0].mxu0
    %v1645 = vadd.f32 %v1555, %v1644
    %v1646 = vpop.f32.mrb[0].mxu0
    %1647 = vmatprep.mubr.f32.mxu0 0.0
    %1648 = vmatmul.mubr.f32.gmra.mrb[0].mxu0 %v1566
    %v1649 = vpop.f32.mrb[0].mxu0
    %v1650 = vadd.f32 %v1555, %v1649
    %v1651 = vpop.f32.mrb[0].mxu0
    %1652 = vdwg.mxu0
    %v1653 = vld [vmem:[%s2 + $0x40] sm:$0xff]
    %v1654 = vld [vmem:[%s2 + $0x48] sm:$0xff]
    %v1655 = vld [vmem:[%s2 + $0x50] sm:$0xff]
    %v1656 = vld [vmem:[%s2 + $0x58] sm:$0xff]
    %v1657 = vld [vmem:[%s2 + $0x60] sm:$0xff]
    %v1658 = vld [vmem:[%s2 + $0x68] sm:$0xff]
    %v1659 = vld [vmem:[%s2 + $0x70] sm:$0xff]
    %v1660 = vld [vmem:[%s2 + $0x78] sm:$0xff]
    %v1661 = vld [vmem:[%s2 + $0x80] sm:$0xff]
    %v1662 = vld [vmem:[%s2 + $0x88] sm:$0xff]
    %v1663 = vld [vmem:[%s2 + $0x90] sm:$0xff]
    %v1664 = vld [vmem:[%s2 + $0x98] sm:$0xff]
    %v1666 = vsel %vm364, %v1635, 0
    %v1669 = vsel %vm364, %v1640, 0
    %v1672 = vsel %vm364, %v1645, 0
    %v1675 = vsel %vm364, %v1650, 0
    %1677 = vmatprep.subr.mxu0 %v1654
    %1678 = vmatpush1.msra.mxu0 %v1653
    %1679 = vmatprep.subr.mxu0 %v1656
    %1680 = vmatpush1.msra.mxu0 %v1655
    %1681 = vmatprep.subr.mxu0 0.0
    %1682 = vmatpush1.msra.mxu0 0.0
    %1683 = vmatprep.subr.mxu0 0.0
    %1684 = vmatpush1.msra.mxu0 0.0
    %1685 = vmatprep.subr.mxu0 0.0
    %1686 = vmatpush1.msra.mxu0 0.0
    %1687 = vmatprep.subr.mxu0 0.0
    %1688 = vmatpush1.msra.mxu0 0.0
    %1689 = vmatprep.subr.mxu0 0.0
    %1690 = vmatpush1.msra.mxu0 0.0
    %1691 = vmatprep.subr.mxu0 0.0
    %1692 = vmatpush1.msra.mxu0 0.0
    %1693 = vmatprep.subr.mxu0 0.0
    %1694 = vmatpush1.msra.mxu0 0.0
    %1695 = vmatprep.subr.mxu0 0.0
    %1696 = vmatpush1.msra.mxu0 0.0
    %1697 = vmatprep.subr.mxu0 0.0
    %1698 = vmatpush1.msra.mxu0 0.0
    %1699 = vmatprep.subr.mxu0 0.0
    %1700 = vmatpush1.msra.mxu0 0.0
    %1701 = vmatprep.subr.mxu0 0.0
    %1702 = vmatpush1.msra.mxu0 0.0
    %1703 = vmatprep.subr.mxu0 0.0
    %1704 = vmatpush1.msra.mxu0 0.0
    %1705 = vmatprep.subr.mxu0 0.0
    %1706 = vmatpush1.msra.mxu0 0.0
    %1707 = vmatprep.subr.mxu0 0.0
    %1708 = vmatpush1.msra.mxu0 0.0
    %1709 = vmatprep.subr.mxu0 0.0
    %1710 = vmatpush1.msra.mxu0 0.0
    %1711 = vmatprep.subr.mxu0 0.0
    %1712 = vmatpush1.msra.mxu0 0.0
    %1713 = vmatprep.subr.mxu0 0.0
    %1714 = vmatpush1.msra.mxu0 0.0
    %1715 = vmatprep.subr.mxu0 0.0
    %1716 = vmatpush1.msra.mxu0 0.0
    %1717 = vmatprep.subr.mxu0 0.0
    %1718 = vmatpush1.msra.mxu0 0.0
    %1719 = vmatprep.subr.mxu0 0.0
    %1720 = vmatpush1.msra.mxu0 0.0
    %1721 = vmatprep.subr.mxu0 0.0
    %1722 = vmatpush1.msra.mxu0 0.0
    %1723 = vmatprep.subr.mxu0 0.0
    %1724 = vmatpush1.msra.mxu0 0.0
    %1725 = vmatprep.subr.mxu0 0.0
    %1726 = vmatpush1.msra.mxu0 0.0
    %1727 = vmatprep.subr.mxu0 0.0
    %1728 = vmatpush1.msra.mxu0 0.0
    %1729 = vmatprep.subr.mxu0 0.0
    %1730 = vmatpush1.msra.mxu0 0.0
    %1731 = vmatprep.subr.mxu0 0.0
    %1732 = vmatpush1.msra.mxu0 0.0
    %1733 = vmatprep.subr.mxu0 0.0
    %1734 = vmatpush1.msra.mxu0 0.0
    %1735 = vmatprep.subr.mxu0 0.0
    %1736 = vmatpush1.msra.mxu0 0.0
    %1737 = vmatprep.subr.mxu0 0.0
    %1738 = vmatpush1.msra.mxu0 0.0
    %1739 = vmatprep.subr.mxu0 0.0
    %1740 = vmatpush1.msra.mxu0 0.0
    %1741 = vmatprep.mubr.f32.mxu0 0.0
    %1742 = vmatmul.mubr.f32.gmra.mrb[0].mxu0 %v1666
    %v1743 = vpop.f32.mrb[0].mxu0
    %v1744 = vadd.f32 0.0, %v1743
    %v1745 = vpop.f32.mrb[0].mxu0
    %v1746 = vadd.f32 0.0, %v1745
    %1747 = vmatprep.mubr.f32.mxu0 0.0
    %1748 = vmatmul.mubr.f32.gmra.mrb[0].mxu0 %v1669
    %v1749 = vpop.f32.mrb[0].mxu0
    %v1750 = vadd.f32 0.0, %v1749
    %v1751 = vpop.f32.mrb[0].mxu0
    %v1752 = vadd.f32 0.0, %v1751
    %1753 = vmatprep.mubr.f32.mxu0 0.0
    %1754 = vmatmul.mubr.f32.gmra.mrb[0].mxu0 %v1672
    %v1755 = vpop.f32.mrb[0].mxu0
    %v1756 = vadd.f32 0.0, %v1755
    %v1757 = vpop.f32.mrb[0].mxu0
    %v1758 = vadd.f32 0.0, %v1757
    %1759 = vmatprep.mubr.f32.mxu0 0.0
    %1760 = vmatmul.mubr.f32.gmra.mrb[0].mxu0 %v1675
    %v1761 = vpop.f32.mrb[0].mxu0
    %v1762 = vadd.f32 0.0, %v1761
    %v1763 = vpop.f32.mrb[0].mxu0
    %v1764 = vadd.f32 0.0, %v1763
    %1765 = vdwg.mxu0
    %v1766 = vmul.f32 %v1744, %v1657
    %v1767 = vmul.f32 %v1746, %v1658
    %v1768 = vmul.f32 %v1750, %v1659
    %v1769 = vmul.f32 %v1752, %v1660
    %v1770 = vmul.f32 %v1756, %v1661
    %v1771 = vmul.f32 %v1758, %v1662
    %v1772 = vmul.f32 %v1762, %v1663
    %v1773 = vmul.f32 %v1764, %v1664
    %v1774 = vld [vmem:[%s1 + $0x358] sm:$0x3]
    %v1776 = vsel %vm369, %v1774, 0
    %1778 = vmatprep.subr.mxu0 %v1767
    %1779 = vmatpush1.msra.mxu0 %v1766
    %1780 = vmatprep.subr.mxu0 %v1769
    %1781 = vmatpush1.msra.mxu0 %v1768
    %1782 = vmatprep.subr.mxu0 %v1771
    %1783 = vmatpush1.msra.mxu0 %v1770
    %1784 = vmatprep.subr.mxu0 %v1773
    %1785 = vmatpush1.msra.mxu0 %v1772
    %1786 = vmatprep.subr.mxu0 0.0
    %1787 = vmatpush1.msra.mxu0 0.0
    %1788 = vmatprep.subr.mxu0 0.0
    %1789 = vmatpush1.msra.mxu0 0.0
    %1790 = vmatprep.subr.mxu0 0.0
    %1791 = vmatpush1.msra.mxu0 0.0
    %1792 = vmatprep.subr.mxu0 0.0
    %1793 = vmatpush1.msra.mxu0 0.0
    %1794 = vmatprep.subr.mxu0 0.0
    %1795 = vmatpush1.msra.mxu0 0.0
    %1796 = vmatprep.subr.mxu0 0.0
    %1797 = vmatpush1.msra.mxu0 0.0
    %1798 = vmatprep.subr.mxu0 0.0
    %1799 = vmatpush1.msra.mxu0 0.0
    %1800 = vmatprep.subr.mxu0 0.0
    %1801 = vmatpush1.msra.mxu0 0.0
    %1802 = vmatprep.subr.mxu0 0.0
    %1803 = vmatpush1.msra.mxu0 0.0
    %1804 = vmatprep.subr.mxu0 0.0
    %1805 = vmatpush1.msra.mxu0 0.0
    %1806 = vmatprep.subr.mxu0 0.0
    %1807 = vmatpush1.msra.mxu0 0.0
    %1808 = vmatprep.subr.mxu0 0.0
    %1809 = vmatpush1.msra.mxu0 0.0
    %1810 = vmatprep.subr.mxu0 0.0
    %1811 = vmatpush1.msra.mxu0 0.0
    %1812 = vmatprep.subr.mxu0 0.0
    %1813 = vmatpush1.msra.mxu0 0.0
    %1814 = vmatprep.subr.mxu0 0.0
    %1815 = vmatpush1.msra.mxu0 0.0
    %1816 = vmatprep.subr.mxu0 0.0
    %1817 = vmatpush1.msra.mxu0 0.0
    %1818 = vmatprep.subr.mxu0 0.0
    %1819 = vmatpush1.msra.mxu0 0.0
    %1820 = vmatprep.subr.mxu0 0.0
    %1821 = vmatpush1.msra.mxu0 0.0
    %1822 = vmatprep.subr.mxu0 0.0
    %1823 = vmatpush1.msra.mxu0 0.0
    %1824 = vmatprep.subr.mxu0 0.0
    %1825 = vmatpush1.msra.mxu0 0.0
    %1826 = vmatprep.subr.mxu0 0.0
    %1827 = vmatpush1.msra.mxu0 0.0
    %1828 = vmatprep.subr.mxu0 0.0
    %1829 = vmatpush1.msra.mxu0 0.0
    %1830 = vmatprep.subr.mxu0 0.0
    %1831 = vmatpush1.msra.mxu0 0.0
    %1832 = vmatprep.subr.mxu0 0.0
    %1833 = vmatpush1.msra.mxu0 0.0
    %1834 = vmatprep.subr.mxu0 0.0
    %1835 = vmatpush1.msra.mxu0 0.0
    %1836 = vmatprep.subr.mxu0 0.0
    %1837 = vmatpush1.msra.mxu0 0.0
    %1838 = vmatprep.subr.mxu0 0.0
    %1839 = vmatpush1.msra.mxu0 0.0
    %1840 = vmatprep.subr.mxu0 0.0
    %1841 = vmatpush1.msra.mxu0 0.0
    %1842 = vmatprep.mubr.f32.mxu0 0.0
    %1843 = vmatmul.mubr.f32.gmra.mrb[0].mxu0 %v1776
    %v1844 = vpop.f32.mrb[0].mxu0
    %v1845 = vadd.f32 0.0, %v1844
    %v1846 = vpop.f32.mrb[0].mxu0
    %v1847 = vadd.f32 0.0, %v1846
    %1848 = vdwg.mxu0
    %v1849 = vadd.f32 %v1845, %v1847
    %1850 = vst [vmem:[#allocation2] sm:$0x3] %v1849
    // Predicated region
    $region14: #{forward.1} parent=1 // pred_check
      _
    $region15: #{forward.1} parent=1 // pred_check_branch
      %1852 = sbr.rel (0) target = $region17
    $region16: #{forward.1} parent=1 // pred_region
      %s1854 = ssub.s32 32, 32
      %1855 = vsyncadd [#allocation3], %s1854
      %s1857 = sshll.u32 [#allocation2], 4
      %s1858 = int_to_ptr.vmem [resolvable:$true] %s1857
      %1860 = dma.vmem_to_hbm [thread:$0]  %s1858, 32, %s3, [#allocation3]
    $region17: #{forward.1} parent=1 // pred_fallthru
      _
    // Predicated region
    $region18: #{forward.1} parent=1 // pred_check
      _
    $region19: #{forward.1} parent=1 // pred_check_branch
      %1862 = sbr.rel (0) target = $region21
    $region20: #{forward.1} parent=1 // pred_region
      %1863 = dma.done [#allocation3], 32
    $region21: #{forward.1} parent=1 // pred_fallthru
      _
    %1864 = vsyncpa [#allocation3], 1

</llo_original>
